<compile_context>
chip_gen: v6e
topology: v6e:2x2x1
jax: 0.10.0
libtpu: 0.0.40
codegen_flags: <defaults>
</compile_context>

<pallas_src>
import functools

import jax
import jax.numpy as jnp
from jax.experimental import pallas as pl
from jax.experimental.pallas import tpu as pltpu

_BN_EPS = 1e-5
# eval-mode BatchNorm1d with fresh running stats (mean=0, var=1, affine=identity):
#   y = x / sqrt(1 + eps)   -> folded into the preceding Linear's W and b.
_BN_SCALE = float(1.0 / (1.0 + _BN_EPS) ** 0.5)


def _round_up(n, m=128):
    return ((n + m - 1) // m) * m


# ----------------------------------------------------------------------------
# fused forward kernel
# ----------------------------------------------------------------------------
def _vq_fused_kernel(*refs, de_pad):
    x_ref, yf_ref, yr_ref, m_ref = refs[:4]
    loss_ref = refs[-1]
    (w_enc, b_enc, w_et1, b_et1, w_et2, b_et2,
     w_dn1, b_dn1, w_dn2, b_dn2,
     w_up1, b_up1, w_up2, b_up2, w_up3, b_up3,
     w_upd, b_upd, w_dec, b_dec,
     w_df1, b_df1, w_df2, b_df2,
     w_dr1, b_dr1, w_dr2, b_dr2) = refs[4:-1]

    def dot(a, w_ref, b_ref):
        # bf16 MXU matmul with f32 accumulation, bias add in f32.
        return jnp.dot(a.astype(jnp.bfloat16), w_ref[...],
                       preferred_element_type=jnp.float32) + b_ref[...]

    def gelu(v):  # tanh-approx GELU (EUP-friendly)
        return jax.nn.gelu(v, approximate=True)

    x = x_ref[...]                                   # [TM, T_pad] bf16

    # encode: encoder stand-in + encode_task_layer (Linear, Tanh, Linear)
    enc = dot(x, w_enc, b_enc)
    h = jnp.tanh(dot(enc, w_et1, b_et1))
    tq = dot(h, w_et2, b_et2)                        # to_quantizer_features

    # downcast_layer: (Linear+BN, GELU), (Linear+BN, Tanh)   [BN folded into W/b]
    h = gelu(dot(tq, w_dn1, b_dn1))
    q = jnp.tanh(dot(h, w_dn2, b_dn2))               # quantize (latent)

    # upcast_layer: 3x (Linear+BN, act)
    h = gelu(dot(q, w_up1, b_up1))
    h = gelu(dot(h, w_up2, b_up2))
    qu = jnp.tanh(dot(h, w_up3, b_up3))

    # upcast_decoder residual (transformer stand-in) fused in-kernel
    qu = qu + dot(qu, w_upd, b_upd)

    # decoder_freq / decoder_raw stand-ins fused into one wide matmul, then split
    dec = dot(qu, w_dec, b_dec)                      # [TM, 2*DE_pad]
    df = dec[:, :de_pad]
    dr = dec[:, de_pad:]

    # decode_task_layer_{freq,raw}: Linear, Tanh, Linear
    hf = jnp.tanh(dot(df, w_df1, b_df1))
    xrec_f = dot(hf, w_df2, b_df2)                   # [TM, OF_pad]
    hr = jnp.tanh(dot(dr, w_dr1, b_dr1))
    xrec_r = dot(hr, w_dr2, b_dr2)                   # [TM, OR_pad]

    # masked-MSE partial sums (mask/target padding is zero -> contributes nothing)
    m = m_ref[...]                                   # [TM, 1]
    ef = xrec_f * m - yf_ref[...]
    er = xrec_r * m - yr_ref[...]
    sse_f = jnp.sum(ef * ef)
    sse_r = jnp.sum(er * er)

    lane = jax.lax.broadcasted_iota(jnp.int32, (1, 1, 128), 2)
    loss_ref[...] = jnp.where(lane == 0, sse_f,
                              jnp.where(lane == 1, sse_r, 0.0))


# ----------------------------------------------------------------------------
# deterministic parameter construction (padded to 128 lanes, BN folded, bf16)
# ----------------------------------------------------------------------------
def _trunc_normal(key, shape, std=0.02):
    return jax.random.truncated_normal(key, -2.0, 2.0, shape, jnp.float32) * std


def make_params(key, *, t, enc_embd, dec_embd, embed_dim, latent_dim, out_dim):
    keys = iter(jax.random.split(key, 32))

    def lin(din, dout, bn=False):
        w = _trunc_normal(next(keys), (din, dout))
        b = jnp.zeros((dout,), jnp.float32)
        if bn:  # fold eval-mode BatchNorm scale
            w = w * _BN_SCALE
            b = b * _BN_SCALE
        wp = jnp.zeros((_round_up(din), _round_up(dout)), jnp.float32)
        wp = wp.at[:din, :dout].set(w)
        bp = jnp.zeros((1, _round_up(dout)), jnp.float32).at[0, :dout].set(b)
        return wp.astype(jnp.bfloat16), bp

    d2 = 2 * embed_dim
    w_enc, b_enc = lin(t, enc_embd)                 # encoder stand-in
    w_et1, b_et1 = lin(enc_embd, enc_embd)          # encode_task: Linear, Tanh
    w_et2, b_et2 = lin(enc_embd, embed_dim)         # encode_task: Linear
    w_dn1, b_dn1 = lin(embed_dim, d2, bn=True)      # downcast
    w_dn2, b_dn2 = lin(d2, latent_dim, bn=True)
    w_up1, b_up1 = lin(latent_dim, d2, bn=True)     # upcast
    w_up2, b_up2 = lin(d2, d2, bn=True)
    w_up3, b_up3 = lin(d2, embed_dim, bn=True)
    w_upd, b_upd = lin(embed_dim, embed_dim)        # upcast_decoder stand-in
    w_dfq, b_dfq = lin(embed_dim, dec_embd)         # decoder_freq stand-in
    w_drw, b_drw = lin(embed_dim, dec_embd)         # decoder_raw stand-in
    w_dec = jnp.concatenate([w_dfq, w_drw], axis=1)
    b_dec = jnp.concatenate([b_dfq, b_drw], axis=1)
    w_df1, b_df1 = lin(dec_embd, dec_embd)          # decode_task_freq
    w_df2, b_df2 = lin(dec_embd, out_dim // 2)
    w_dr1, b_dr1 = lin(dec_embd, dec_embd)          # decode_task_raw
    w_dr2, b_dr2 = lin(dec_embd, out_dim)

    wb = [w_enc, b_enc, w_et1, b_et1, w_et2, b_et2,
          w_dn1, b_dn1, w_dn2, b_dn2,
          w_up1, b_up1, w_up2, b_up2, w_up3, b_up3,
          w_upd, b_upd, w_dec, b_dec,
          w_df1, b_df1, w_df2, b_df2,
          w_dr1, b_dr1, w_dr2, b_dr2]
    dims = dict(t_pad=_round_up(t),
                out_freq=out_dim // 2, of_pad=_round_up(out_dim // 2),
                out_raw=out_dim, or_pad=_round_up(out_dim),
                de_pad=_round_up(dec_embd))
    return {"wb": wb, "dims": dims}


# ----------------------------------------------------------------------------
# VQ_Align.forward (== VQ.forward; returns (loss, None, log))
# ----------------------------------------------------------------------------
def vq_align_forward(params, x, y_freq, y_raw, input_mask, *, tm=256):
    """x: [B, N, T], y_freq: [B, N, out_dim//2], y_raw: [B, N, out_dim],
    input_mask: [B, N] (float 0/1)."""
    dims = params["dims"]
    wb = params["wb"]
    b, n, t = x.shape
    rows = b * n

    tm = min(tm, _round_up(rows, 8))            # row tile, multiple of 8
    r_pad = -(-rows // tm) * tm
    num_tiles = r_pad // tm

    def pad_rf(a2d, f_pad, dtype):
        r, f = a2d.shape
        out = jnp.zeros((r_pad, f_pad), dtype)
        return out.at[:r, :f].set(a2d.astype(dtype))

    xf = pad_rf(x.reshape(rows, t), dims["t_pad"], jnp.bfloat16)
    yf = pad_rf(y_freq.reshape(rows, -1), dims["of_pad"], jnp.float32)
    yr = pad_rf(y_raw.reshape(rows, -1), dims["or_pad"], jnp.float32)
    mc = pad_rf(input_mask.reshape(rows, 1), 1, jnp.float32)

    def row_spec(f):
        return pl.BlockSpec((tm, f), lambda i: (i, 0))

    in_specs = ([row_spec(dims["t_pad"]), row_spec(dims["of_pad"]),
                 row_spec(dims["or_pad"]), row_spec(1)]
                + [pl.BlockSpec(a.shape, lambda i: (0, 0)) for a in wb])

    sse = pl.pallas_call(
        functools.partial(_vq_fused_kernel, de_pad=dims["de_pad"]),
        out_shape=jax.ShapeDtypeStruct((num_tiles, 1, 128), jnp.float32),
        grid=(num_tiles,),
        in_specs=in_specs,
        out_specs=pl.BlockSpec((1, 1, 128), lambda i: (i, 0, 0)),
        compiler_params=pltpu.CompilerParams(
            dimension_semantics=("parallel",)),
    )(xf, yf, yr, mc, *wb)

    # finish the MSE means with the TRUE (unpadded) element counts
    rec_freq_loss = jnp.sum(sse[:, 0, 0]) / float(rows * dims["out_freq"])
    rec_raw_loss = jnp.sum(sse[:, 0, 1]) / float(rows * dims["out_raw"])
    loss = rec_freq_loss + rec_raw_loss
    log = {
        "train/rec_freq_loss": rec_freq_loss,
        "train/rec_raw_loss": rec_raw_loss,
        "train/total_loss": loss,
    }
    return loss, None, log


# ----------------------------------------------------------------------------
if __name__ == "__main__":
    # small synthetic shapes consistent with x: [B, N, T]
    B, N, T = 2, 8, 16
    ENC_EMBD, DEC_EMBD = 32, 32
    EMBED_DIM, LATENT_DIM, OUT_DIM = 16, 8, 16

    key = jax.random.PRNGKey(0)
    k_p, k_x, k_f, k_r = jax.random.split(key, 4)

    params = make_params(k_p, t=T, enc_embd=ENC_EMBD, dec_embd=DEC_EMBD,
                         embed_dim=EMBED_DIM, latent_dim=LATENT_DIM, out_dim=OUT_DIM)

    x = jax.random.normal(k_x, (B, N, T), jnp.float32)
    y_freq = jax.random.normal(k_f, (B, N, OUT_DIM // 2), jnp.float32)
    y_raw = jax.random.normal(k_r, (B, N, OUT_DIM), jnp.float32)
    # deterministic 0/1 token mask (last two windows masked out)
    input_mask = jnp.tile((jnp.arange(N) < N - 2).astype(jnp.float32)[None, :], (B, 1))

    fwd = jax.jit(functools.partial(vq_align_forward, params))
    loss, _, log = fwd(x, y_freq, y_raw, input_mask)
    jax.block_until_ready(loss)
    jax.block_until_ready(log["train/rec_freq_loss"])
    jax.block_until_ready(log["train/rec_raw_loss"])
    print("KERNEL_OK")
</pallas_src>

<mosaic_0001>
module attributes {stable_mosaic.version = 11 : i64} {
  func.func @_vq_fused_kernel(%arg0: i32, %arg1: memref<16x128xbf16, #tpu.memory_space<vmem>>, %arg2: memref<16x128xf32, #tpu.memory_space<vmem>>, %arg3: memref<16x128xf32, #tpu.memory_space<vmem>>, %arg4: memref<16x1xf32, #tpu.memory_space<vmem>>, %arg5: memref<128x128xbf16, #tpu.memory_space<vmem>>, %arg6: memref<1x128xf32, #tpu.memory_space<vmem>>, %arg7: memref<128x128xbf16, #tpu.memory_space<vmem>>, %arg8: memref<1x128xf32, #tpu.memory_space<vmem>>, %arg9: memref<128x128xbf16, #tpu.memory_space<vmem>>, %arg10: memref<1x128xf32, #tpu.memory_space<vmem>>, %arg11: memref<128x128xbf16, #tpu.memory_space<vmem>>, %arg12: memref<1x128xf32, #tpu.memory_space<vmem>>, %arg13: memref<128x128xbf16, #tpu.memory_space<vmem>>, %arg14: memref<1x128xf32, #tpu.memory_space<vmem>>, %arg15: memref<128x128xbf16, #tpu.memory_space<vmem>>, %arg16: memref<1x128xf32, #tpu.memory_space<vmem>>, %arg17: memref<128x128xbf16, #tpu.memory_space<vmem>>, %arg18: memref<1x128xf32, #tpu.memory_space<vmem>>, %arg19: memref<128x128xbf16, #tpu.memory_space<vmem>>, %arg20: memref<1x128xf32, #tpu.memory_space<vmem>>, %arg21: memref<128x128xbf16, #tpu.memory_space<vmem>>, %arg22: memref<1x128xf32, #tpu.memory_space<vmem>>, %arg23: memref<128x256xbf16, #tpu.memory_space<vmem>>, %arg24: memref<1x256xf32, #tpu.memory_space<vmem>>, %arg25: memref<128x128xbf16, #tpu.memory_space<vmem>>, %arg26: memref<1x128xf32, #tpu.memory_space<vmem>>, %arg27: memref<128x128xbf16, #tpu.memory_space<vmem>>, %arg28: memref<1x128xf32, #tpu.memory_space<vmem>>, %arg29: memref<128x128xbf16, #tpu.memory_space<vmem>>, %arg30: memref<1x128xf32, #tpu.memory_space<vmem>>, %arg31: memref<128x128xbf16, #tpu.memory_space<vmem>>, %arg32: memref<1x128xf32, #tpu.memory_space<vmem>>, %arg33: memref<1x1x128xf32, #tpu.memory_space<vmem>>) attributes {dimension_semantics = [#tpu.dimension_semantics<parallel>], iteration_bounds = array<i64: 1>, scalar_prefetch = 0 : i64, scratch_operands = 0 : i64, tpu.core_type = #tpu.core_type<tc>, window_params = [{transform_indices = @transform_0, window_bounds = array<i64: 16, 128>}, {transform_indices = @transform_1, window_bounds = array<i64: 16, 128>}, {transform_indices = @transform_2, window_bounds = array<i64: 16, 128>}, {transform_indices = @transform_3, window_bounds = array<i64: 16, 1>}, {pipeline_mode = #tpu.pipeline_mode<synchronous>, transform_indices = @transform_4, window_bounds = array<i64: 128, 128>}, {pipeline_mode = #tpu.pipeline_mode<synchronous>, transform_indices = @transform_5, window_bounds = array<i64: 1, 128>}, {pipeline_mode = #tpu.pipeline_mode<synchronous>, transform_indices = @transform_6, window_bounds = array<i64: 128, 128>}, {pipeline_mode = #tpu.pipeline_mode<synchronous>, transform_indices = @transform_7, window_bounds = array<i64: 1, 128>}, {pipeline_mode = #tpu.pipeline_mode<synchronous>, transform_indices = @transform_8, window_bounds = array<i64: 128, 128>}, {pipeline_mode = #tpu.pipeline_mode<synchronous>, transform_indices = @transform_9, window_bounds = array<i64: 1, 128>}, {pipeline_mode = #tpu.pipeline_mode<synchronous>, transform_indices = @transform_10, window_bounds = array<i64: 128, 128>}, {pipeline_mode = #tpu.pipeline_mode<synchronous>, transform_indices = @transform_11, window_bounds = array<i64: 1, 128>}, {pipeline_mode = #tpu.pipeline_mode<synchronous>, transform_indices = @transform_12, window_bounds = array<i64: 128, 128>}, {pipeline_mode = #tpu.pipeline_mode<synchronous>, transform_indices = @transform_13, window_bounds = array<i64: 1, 128>}, {pipeline_mode = #tpu.pipeline_mode<synchronous>, transform_indices = @transform_14, window_bounds = array<i64: 128, 128>}, {pipeline_mode = #tpu.pipeline_mode<synchronous>, transform_indices = @transform_15, window_bounds = array<i64: 1, 128>}, {pipeline_mode = #tpu.pipeline_mode<synchronous>, transform_indices = @transform_16, window_bounds = array<i64: 128, 128>}, {pipeline_mode = #tpu.pipeline_mode<synchronous>, transform_indices = @transform_17, window_bounds = array<i64: 1, 128>}, {pipeline_mode = #tpu.pipeline_mode<synchronous>, transform_indices = @transform_18, window_bounds = array<i64: 128, 128>}, {pipeline_mode = #tpu.pipeline_mode<synchronous>, transform_indices = @transform_19, window_bounds = array<i64: 1, 128>}, {pipeline_mode = #tpu.pipeline_mode<synchronous>, transform_indices = @transform_20, window_bounds = array<i64: 128, 128>}, {pipeline_mode = #tpu.pipeline_mode<synchronous>, transform_indices = @transform_21, window_bounds = array<i64: 1, 128>}, {pipeline_mode = #tpu.pipeline_mode<synchronous>, transform_indices = @transform_22, window_bounds = array<i64: 128, 256>}, {pipeline_mode = #tpu.pipeline_mode<synchronous>, transform_indices = @transform_23, window_bounds = array<i64: 1, 256>}, {pipeline_mode = #tpu.pipeline_mode<synchronous>, transform_indices = @transform_24, window_bounds = array<i64: 128, 128>}, {pipeline_mode = #tpu.pipeline_mode<synchronous>, transform_indices = @transform_25, window_bounds = array<i64: 1, 128>}, {pipeline_mode = #tpu.pipeline_mode<synchronous>, transform_indices = @transform_26, window_bounds = array<i64: 128, 128>}, {pipeline_mode = #tpu.pipeline_mode<synchronous>, transform_indices = @transform_27, window_bounds = array<i64: 1, 128>}, {pipeline_mode = #tpu.pipeline_mode<synchronous>, transform_indices = @transform_28, window_bounds = array<i64: 128, 128>}, {pipeline_mode = #tpu.pipeline_mode<synchronous>, transform_indices = @transform_29, window_bounds = array<i64: 1, 128>}, {pipeline_mode = #tpu.pipeline_mode<synchronous>, transform_indices = @transform_30, window_bounds = array<i64: 128, 128>}, {pipeline_mode = #tpu.pipeline_mode<synchronous>, transform_indices = @transform_31, window_bounds = array<i64: 1, 128>}, {transform_indices = @transform_32, window_bounds = array<i64: 1, 1, 128>}]} {
    %c0 = arith.constant 0 : index
    %c0_0 = arith.constant 0 : index
    %0 = vector.load %arg1[%c0, %c0_0] : memref<16x128xbf16, #tpu.memory_space<vmem>>, vector<16x128xbf16>
    %c0_1 = arith.constant 0 : index
    %c0_2 = arith.constant 0 : index
    %1 = vector.load %arg5[%c0_1, %c0_2] : memref<128x128xbf16, #tpu.memory_space<vmem>>, vector<128x128xbf16>
    %cst = arith.constant dense<0.000000e+00> : vector<16x128xf32>
    %2 = tpu.matmul %0, %1, %cst {dimension_numbers = #tpu.dot_dimension_numbers<[1], [0], [0], [1], [0, 0, 1, 1], [], []>} : vector<16x128xbf16>, vector<128x128xbf16>, vector<16x128xf32> -> vector<16x128xf32>
    %c0_3 = arith.constant 0 : index
    %c0_4 = arith.constant 0 : index
    %3 = vector.load %arg6[%c0_3, %c0_4] : memref<1x128xf32, #tpu.memory_space<vmem>>, vector<1x128xf32>
    %4 = vector.broadcast %3 : vector<1x128xf32> to vector<16x128xf32>
    %5 = arith.addf %2, %4 : vector<16x128xf32>
    %6 = arith.truncf %5 : vector<16x128xf32> to vector<16x128xbf16>
    %c0_5 = arith.constant 0 : index
    %c0_6 = arith.constant 0 : index
    %7 = vector.load %arg7[%c0_5, %c0_6] : memref<128x128xbf16, #tpu.memory_space<vmem>>, vector<128x128xbf16>
    %cst_7 = arith.constant dense<0.000000e+00> : vector<16x128xf32>
    %8 = tpu.matmul %6, %7, %cst_7 {dimension_numbers = #tpu.dot_dimension_numbers<[1], [0], [0], [1], [0, 0, 1, 1], [], []>} : vector<16x128xbf16>, vector<128x128xbf16>, vector<16x128xf32> -> vector<16x128xf32>
    %c0_8 = arith.constant 0 : index
    %c0_9 = arith.constant 0 : index
    %9 = vector.load %arg8[%c0_8, %c0_9] : memref<1x128xf32, #tpu.memory_space<vmem>>, vector<1x128xf32>
    %10 = vector.broadcast %9 : vector<1x128xf32> to vector<16x128xf32>
    %11 = arith.addf %8, %10 : vector<16x128xf32>
    %12 = math.tanh %11 : vector<16x128xf32>
    %13 = arith.truncf %12 : vector<16x128xf32> to vector<16x128xbf16>
    %c0_10 = arith.constant 0 : index
    %c0_11 = arith.constant 0 : index
    %14 = vector.load %arg9[%c0_10, %c0_11] : memref<128x128xbf16, #tpu.memory_space<vmem>>, vector<128x128xbf16>
    %cst_12 = arith.constant dense<0.000000e+00> : vector<16x128xf32>
    %15 = tpu.matmul %13, %14, %cst_12 {dimension_numbers = #tpu.dot_dimension_numbers<[1], [0], [0], [1], [0, 0, 1, 1], [], []>} : vector<16x128xbf16>, vector<128x128xbf16>, vector<16x128xf32> -> vector<16x128xf32>
    %c0_13 = arith.constant 0 : index
    %c0_14 = arith.constant 0 : index
    %16 = vector.load %arg10[%c0_13, %c0_14] : memref<1x128xf32, #tpu.memory_space<vmem>>, vector<1x128xf32>
    %17 = vector.broadcast %16 : vector<1x128xf32> to vector<16x128xf32>
    %18 = arith.addf %15, %17 : vector<16x128xf32>
    %19 = arith.truncf %18 : vector<16x128xf32> to vector<16x128xbf16>
    %c0_15 = arith.constant 0 : index
    %c0_16 = arith.constant 0 : index
    %20 = vector.load %arg11[%c0_15, %c0_16] : memref<128x128xbf16, #tpu.memory_space<vmem>>, vector<128x128xbf16>
    %cst_17 = arith.constant dense<0.000000e+00> : vector<16x128xf32>
    %21 = tpu.matmul %19, %20, %cst_17 {dimension_numbers = #tpu.dot_dimension_numbers<[1], [0], [0], [1], [0, 0, 1, 1], [], []>} : vector<16x128xbf16>, vector<128x128xbf16>, vector<16x128xf32> -> vector<16x128xf32>
    %c0_18 = arith.constant 0 : index
    %c0_19 = arith.constant 0 : index
    %22 = vector.load %arg12[%c0_18, %c0_19] : memref<1x128xf32, #tpu.memory_space<vmem>>, vector<1x128xf32>
    %23 = vector.broadcast %22 : vector<1x128xf32> to vector<16x128xf32>
    %24 = arith.addf %21, %23 : vector<16x128xf32>
    %25 = arith.mulf %24, %24 : vector<16x128xf32>
    %26 = arith.mulf %24, %25 : vector<16x128xf32>
    %cst_20 = arith.constant 4.471500e-02 : f32
    %27 = vector.broadcast %cst_20 : f32 to vector<16x128xf32>
    %28 = arith.mulf %27, %26 : vector<16x128xf32>
    %29 = arith.addf %24, %28 : vector<16x128xf32>
    %cst_21 = arith.constant 0.797884583 : f32
    %30 = vector.broadcast %cst_21 : f32 to vector<16x128xf32>
    %31 = arith.mulf %30, %29 : vector<16x128xf32>
    %32 = math.tanh %31 : vector<16x128xf32>
    %cst_22 = arith.constant 1.000000e+00 : f32
    %33 = vector.broadcast %cst_22 : f32 to vector<16x128xf32>
    %34 = arith.addf %33, %32 : vector<16x128xf32>
    %cst_23 = arith.constant 5.000000e-01 : f32
    %35 = vector.broadcast %cst_23 : f32 to vector<16x128xf32>
    %36 = arith.mulf %35, %34 : vector<16x128xf32>
    %37 = arith.mulf %24, %36 : vector<16x128xf32>
    %38 = arith.truncf %37 : vector<16x128xf32> to vector<16x128xbf16>
    %c0_24 = arith.constant 0 : index
    %c0_25 = arith.constant 0 : index
    %39 = vector.load %arg13[%c0_24, %c0_25] : memref<128x128xbf16, #tpu.memory_space<vmem>>, vector<128x128xbf16>
    %cst_26 = arith.constant dense<0.000000e+00> : vector<16x128xf32>
    %40 = tpu.matmul %38, %39, %cst_26 {dimension_numbers = #tpu.dot_dimension_numbers<[1], [0], [0], [1], [0, 0, 1, 1], [], []>} : vector<16x128xbf16>, vector<128x128xbf16>, vector<16x128xf32> -> vector<16x128xf32>
    %c0_27 = arith.constant 0 : index
    %c0_28 = arith.constant 0 : index
    %41 = vector.load %arg14[%c0_27, %c0_28] : memref<1x128xf32, #tpu.memory_space<vmem>>, vector<1x128xf32>
    %42 = vector.broadcast %41 : vector<1x128xf32> to vector<16x128xf32>
    %43 = arith.addf %40, %42 : vector<16x128xf32>
    %44 = math.tanh %43 : vector<16x128xf32>
    %45 = arith.truncf %44 : vector<16x128xf32> to vector<16x128xbf16>
    %c0_29 = arith.constant 0 : index
    %c0_30 = arith.constant 0 : index
    %46 = vector.load %arg15[%c0_29, %c0_30] : memref<128x128xbf16, #tpu.memory_space<vmem>>, vector<128x128xbf16>
    %cst_31 = arith.constant dense<0.000000e+00> : vector<16x128xf32>
    %47 = tpu.matmul %45, %46, %cst_31 {dimension_numbers = #tpu.dot_dimension_numbers<[1], [0], [0], [1], [0, 0, 1, 1], [], []>} : vector<16x128xbf16>, vector<128x128xbf16>, vector<16x128xf32> -> vector<16x128xf32>
    %c0_32 = arith.constant 0 : index
    %c0_33 = arith.constant 0 : index
    %48 = vector.load %arg16[%c0_32, %c0_33] : memref<1x128xf32, #tpu.memory_space<vmem>>, vector<1x128xf32>
    %49 = vector.broadcast %48 : vector<1x128xf32> to vector<16x128xf32>
    %50 = arith.addf %47, %49 : vector<16x128xf32>
    %51 = arith.mulf %50, %50 : vector<16x128xf32>
    %52 = arith.mulf %50, %51 : vector<16x128xf32>
    %cst_34 = arith.constant 4.471500e-02 : f32
    %53 = vector.broadcast %cst_34 : f32 to vector<16x128xf32>
    %54 = arith.mulf %53, %52 : vector<16x128xf32>
    %55 = arith.addf %50, %54 : vector<16x128xf32>
    %cst_35 = arith.constant 0.797884583 : f32
    %56 = vector.broadcast %cst_35 : f32 to vector<16x128xf32>
    %57 = arith.mulf %56, %55 : vector<16x128xf32>
    %58 = math.tanh %57 : vector<16x128xf32>
    %cst_36 = arith.constant 1.000000e+00 : f32
    %59 = vector.broadcast %cst_36 : f32 to vector<16x128xf32>
    %60 = arith.addf %59, %58 : vector<16x128xf32>
    %cst_37 = arith.constant 5.000000e-01 : f32
    %61 = vector.broadcast %cst_37 : f32 to vector<16x128xf32>
    %62 = arith.mulf %61, %60 : vector<16x128xf32>
    %63 = arith.mulf %50, %62 : vector<16x128xf32>
    %64 = arith.truncf %63 : vector<16x128xf32> to vector<16x128xbf16>
    %c0_38 = arith.constant 0 : index
    %c0_39 = arith.constant 0 : index
    %65 = vector.load %arg17[%c0_38, %c0_39] : memref<128x128xbf16, #tpu.memory_space<vmem>>, vector<128x128xbf16>
    %cst_40 = arith.constant dense<0.000000e+00> : vector<16x128xf32>
    %66 = tpu.matmul %64, %65, %cst_40 {dimension_numbers = #tpu.dot_dimension_numbers<[1], [0], [0], [1], [0, 0, 1, 1], [], []>} : vector<16x128xbf16>, vector<128x128xbf16>, vector<16x128xf32> -> vector<16x128xf32>
    %c0_41 = arith.constant 0 : index
    %c0_42 = arith.constant 0 : index
    %67 = vector.load %arg18[%c0_41, %c0_42] : memref<1x128xf32, #tpu.memory_space<vmem>>, vector<1x128xf32>
    %68 = vector.broadcast %67 : vector<1x128xf32> to vector<16x128xf32>
    %69 = arith.addf %66, %68 : vector<16x128xf32>
    %70 = arith.mulf %69, %69 : vector<16x128xf32>
    %71 = arith.mulf %69, %70 : vector<16x128xf32>
    %cst_43 = arith.constant 4.471500e-02 : f32
    %72 = vector.broadcast %cst_43 : f32 to vector<16x128xf32>
    %73 = arith.mulf %72, %71 : vector<16x128xf32>
    %74 = arith.addf %69, %73 : vector<16x128xf32>
    %cst_44 = arith.constant 0.797884583 : f32
    %75 = vector.broadcast %cst_44 : f32 to vector<16x128xf32>
    %76 = arith.mulf %75, %74 : vector<16x128xf32>
    %77 = math.tanh %76 : vector<16x128xf32>
    %cst_45 = arith.constant 1.000000e+00 : f32
    %78 = vector.broadcast %cst_45 : f32 to vector<16x128xf32>
    %79 = arith.addf %78, %77 : vector<16x128xf32>
    %cst_46 = arith.constant 5.000000e-01 : f32
    %80 = vector.broadcast %cst_46 : f32 to vector<16x128xf32>
    %81 = arith.mulf %80, %79 : vector<16x128xf32>
    %82 = arith.mulf %69, %81 : vector<16x128xf32>
    %83 = arith.truncf %82 : vector<16x128xf32> to vector<16x128xbf16>
    %c0_47 = arith.constant 0 : index
    %c0_48 = arith.constant 0 : index
    %84 = vector.load %arg19[%c0_47, %c0_48] : memref<128x128xbf16, #tpu.memory_space<vmem>>, vector<128x128xbf16>
    %cst_49 = arith.constant dense<0.000000e+00> : vector<16x128xf32>
    %85 = tpu.matmul %83, %84, %cst_49 {dimension_numbers = #tpu.dot_dimension_numbers<[1], [0], [0], [1], [0, 0, 1, 1], [], []>} : vector<16x128xbf16>, vector<128x128xbf16>, vector<16x128xf32> -> vector<16x128xf32>
    %c0_50 = arith.constant 0 : index
    %c0_51 = arith.constant 0 : index
    %86 = vector.load %arg20[%c0_50, %c0_51] : memref<1x128xf32, #tpu.memory_space<vmem>>, vector<1x128xf32>
    %87 = vector.broadcast %86 : vector<1x128xf32> to vector<16x128xf32>
    %88 = arith.addf %85, %87 : vector<16x128xf32>
    %89 = math.tanh %88 : vector<16x128xf32>
    %90 = arith.truncf %89 : vector<16x128xf32> to vector<16x128xbf16>
    %c0_52 = arith.constant 0 : index
    %c0_53 = arith.constant 0 : index
    %91 = vector.load %arg21[%c0_52, %c0_53] : memref<128x128xbf16, #tpu.memory_space<vmem>>, vector<128x128xbf16>
    %cst_54 = arith.constant dense<0.000000e+00> : vector<16x128xf32>
    %92 = tpu.matmul %90, %91, %cst_54 {dimension_numbers = #tpu.dot_dimension_numbers<[1], [0], [0], [1], [0, 0, 1, 1], [], []>} : vector<16x128xbf16>, vector<128x128xbf16>, vector<16x128xf32> -> vector<16x128xf32>
    %c0_55 = arith.constant 0 : index
    %c0_56 = arith.constant 0 : index
    %93 = vector.load %arg22[%c0_55, %c0_56] : memref<1x128xf32, #tpu.memory_space<vmem>>, vector<1x128xf32>
    %94 = vector.broadcast %93 : vector<1x128xf32> to vector<16x128xf32>
    %95 = arith.addf %92, %94 : vector<16x128xf32>
    %96 = arith.addf %89, %95 : vector<16x128xf32>
    %97 = arith.truncf %96 : vector<16x128xf32> to vector<16x128xbf16>
    %c0_57 = arith.constant 0 : index
    %c0_58 = arith.constant 0 : index
    %98 = vector.load %arg23[%c0_57, %c0_58] : memref<128x256xbf16, #tpu.memory_space<vmem>>, vector<128x256xbf16>
    %cst_59 = arith.constant dense<0.000000e+00> : vector<16x256xf32>
    %99 = tpu.matmul %97, %98, %cst_59 {dimension_numbers = #tpu.dot_dimension_numbers<[1], [0], [0], [1], [0, 0, 1, 1], [], []>} : vector<16x128xbf16>, vector<128x256xbf16>, vector<16x256xf32> -> vector<16x256xf32>
    %c0_60 = arith.constant 0 : index
    %c0_61 = arith.constant 0 : index
    %100 = vector.load %arg24[%c0_60, %c0_61] : memref<1x256xf32, #tpu.memory_space<vmem>>, vector<1x256xf32>
    %101 = vector.broadcast %100 : vector<1x256xf32> to vector<16x256xf32>
    %102 = arith.addf %99, %101 : vector<16x256xf32>
    %103 = vector.extract_strided_slice %102 {offsets = [0, 0], sizes = [16, 128], strides = [1, 1]} : vector<16x256xf32> to vector<16x128xf32>
    %104 = vector.extract_strided_slice %102 {offsets = [0, 128], sizes = [16, 128], strides = [1, 1]} : vector<16x256xf32> to vector<16x128xf32>
    %105 = arith.truncf %103 : vector<16x128xf32> to vector<16x128xbf16>
    %c0_62 = arith.constant 0 : index
    %c0_63 = arith.constant 0 : index
    %106 = vector.load %arg25[%c0_62, %c0_63] : memref<128x128xbf16, #tpu.memory_space<vmem>>, vector<128x128xbf16>
    %cst_64 = arith.constant dense<0.000000e+00> : vector<16x128xf32>
    %107 = tpu.matmul %105, %106, %cst_64 {dimension_numbers = #tpu.dot_dimension_numbers<[1], [0], [0], [1], [0, 0, 1, 1], [], []>} : vector<16x128xbf16>, vector<128x128xbf16>, vector<16x128xf32> -> vector<16x128xf32>
    %c0_65 = arith.constant 0 : index
    %c0_66 = arith.constant 0 : index
    %108 = vector.load %arg26[%c0_65, %c0_66] : memref<1x128xf32, #tpu.memory_space<vmem>>, vector<1x128xf32>
    %109 = vector.broadcast %108 : vector<1x128xf32> to vector<16x128xf32>
    %110 = arith.addf %107, %109 : vector<16x128xf32>
    %111 = math.tanh %110 : vector<16x128xf32>
    %112 = arith.truncf %111 : vector<16x128xf32> to vector<16x128xbf16>
    %c0_67 = arith.constant 0 : index
    %c0_68 = arith.constant 0 : index
    %113 = vector.load %arg27[%c0_67, %c0_68] : memref<128x128xbf16, #tpu.memory_space<vmem>>, vector<128x128xbf16>
    %cst_69 = arith.constant dense<0.000000e+00> : vector<16x128xf32>
    %114 = tpu.matmul %112, %113, %cst_69 {dimension_numbers = #tpu.dot_dimension_numbers<[1], [0], [0], [1], [0, 0, 1, 1], [], []>} : vector<16x128xbf16>, vector<128x128xbf16>, vector<16x128xf32> -> vector<16x128xf32>
    %c0_70 = arith.constant 0 : index
    %c0_71 = arith.constant 0 : index
    %115 = vector.load %arg28[%c0_70, %c0_71] : memref<1x128xf32, #tpu.memory_space<vmem>>, vector<1x128xf32>
    %116 = vector.broadcast %115 : vector<1x128xf32> to vector<16x128xf32>
    %117 = arith.addf %114, %116 : vector<16x128xf32>
    %118 = arith.truncf %104 : vector<16x128xf32> to vector<16x128xbf16>
    %c0_72 = arith.constant 0 : index
    %c0_73 = arith.constant 0 : index
    %119 = vector.load %arg29[%c0_72, %c0_73] : memref<128x128xbf16, #tpu.memory_space<vmem>>, vector<128x128xbf16>
    %cst_74 = arith.constant dense<0.000000e+00> : vector<16x128xf32>
    %120 = tpu.matmul %118, %119, %cst_74 {dimension_numbers = #tpu.dot_dimension_numbers<[1], [0], [0], [1], [0, 0, 1, 1], [], []>} : vector<16x128xbf16>, vector<128x128xbf16>, vector<16x128xf32> -> vector<16x128xf32>
    %c0_75 = arith.constant 0 : index
    %c0_76 = arith.constant 0 : index
    %121 = vector.load %arg30[%c0_75, %c0_76] : memref<1x128xf32, #tpu.memory_space<vmem>>, vector<1x128xf32>
    %122 = vector.broadcast %121 : vector<1x128xf32> to vector<16x128xf32>
    %123 = arith.addf %120, %122 : vector<16x128xf32>
    %124 = math.tanh %123 : vector<16x128xf32>
    %125 = arith.truncf %124 : vector<16x128xf32> to vector<16x128xbf16>
    %c0_77 = arith.constant 0 : index
    %c0_78 = arith.constant 0 : index
    %126 = vector.load %arg31[%c0_77, %c0_78] : memref<128x128xbf16, #tpu.memory_space<vmem>>, vector<128x128xbf16>
    %cst_79 = arith.constant dense<0.000000e+00> : vector<16x128xf32>
    %127 = tpu.matmul %125, %126, %cst_79 {dimension_numbers = #tpu.dot_dimension_numbers<[1], [0], [0], [1], [0, 0, 1, 1], [], []>} : vector<16x128xbf16>, vector<128x128xbf16>, vector<16x128xf32> -> vector<16x128xf32>
    %c0_80 = arith.constant 0 : index
    %c0_81 = arith.constant 0 : index
    %128 = vector.load %arg32[%c0_80, %c0_81] : memref<1x128xf32, #tpu.memory_space<vmem>>, vector<1x128xf32>
    %129 = vector.broadcast %128 : vector<1x128xf32> to vector<16x128xf32>
    %130 = arith.addf %127, %129 : vector<16x128xf32>
    %c0_82 = arith.constant 0 : index
    %c0_83 = arith.constant 0 : index
    %131 = vector.load %arg4[%c0_82, %c0_83] : memref<16x1xf32, #tpu.memory_space<vmem>>, vector<16x1xf32>
    %132 = vector.broadcast %131 : vector<16x1xf32> to vector<16x128xf32>
    %133 = arith.mulf %117, %132 : vector<16x128xf32>
    %c0_84 = arith.constant 0 : index
    %c0_85 = arith.constant 0 : index
    %134 = vector.load %arg2[%c0_84, %c0_85] : memref<16x128xf32, #tpu.memory_space<vmem>>, vector<16x128xf32>
    %135 = arith.subf %133, %134 : vector<16x128xf32>
    %136 = vector.broadcast %131 : vector<16x1xf32> to vector<16x128xf32>
    %137 = arith.mulf %130, %136 : vector<16x128xf32>
    %c0_86 = arith.constant 0 : index
    %c0_87 = arith.constant 0 : index
    %138 = vector.load %arg3[%c0_86, %c0_87] : memref<16x128xf32, #tpu.memory_space<vmem>>, vector<16x128xf32>
    %139 = arith.subf %137, %138 : vector<16x128xf32>
    %140 = arith.mulf %135, %135 : vector<16x128xf32>
    %141 = vector.shape_cast %140 : vector<16x128xf32> to vector<1x16x128xf32>
    %cst_88 = arith.constant dense<0.000000e+00> : vector<1xf32>
    %142 = vector.multi_reduction <add>, %141, %cst_88 [1, 2] : vector<1x16x128xf32> to vector<1xf32>
    %143 = vector.shape_cast %142 : vector<1xf32> to vector<1x1x1xf32>
    %144 = vector.extract %143[0, 0, 0] : f32 from vector<1x1x1xf32>
    %145 = arith.mulf %139, %139 : vector<16x128xf32>
    %146 = vector.shape_cast %145 : vector<16x128xf32> to vector<1x16x128xf32>
    %cst_89 = arith.constant dense<0.000000e+00> : vector<1xf32>
    %147 = vector.multi_reduction <add>, %146, %cst_89 [1, 2] : vector<1x16x128xf32> to vector<1xf32>
    %148 = vector.shape_cast %147 : vector<1xf32> to vector<1x1x1xf32>
    %149 = vector.extract %148[0, 0, 0] : f32 from vector<1x1x1xf32>
    %150 = tpu.iota {dimensions = array<i32: 2>} : vector<1x1x128xi32>
    %c0_i32 = arith.constant 0 : i32
    %151 = vector.broadcast %c0_i32 : i32 to vector<1x1x128xi32>
    %152 = arith.cmpi eq, %150, %151 : vector<1x1x128xi32>
    %c1_i32 = arith.constant 1 : i32
    %153 = vector.broadcast %c1_i32 : i32 to vector<1x1x128xi32>
    %154 = arith.cmpi eq, %150, %153 : vector<1x1x128xi32>
    %cst_90 = arith.constant 0.000000e+00 : f32
    %155 = vector.broadcast %149 : f32 to vector<1x1x128xf32>
    %156 = vector.broadcast %cst_90 : f32 to vector<1x1x128xf32>
    %157 = arith.select %154, %155, %156 : vector<1x1x128xi1>, vector<1x1x128xf32>
    %158 = vector.broadcast %144 : f32 to vector<1x1x128xf32>
    %159 = arith.select %152, %158, %157 : vector<1x1x128xi1>, vector<1x1x128xf32>
    %c0_91 = arith.constant 0 : index
    %c0_92 = arith.constant 0 : index
    %c0_93 = arith.constant 0 : index
    %160 = vector.load %arg33[%c0_91, %c0_92, %c0_93] : memref<1x1x128xf32, #tpu.memory_space<vmem>>, vector<1x1x128xf32>
    tpu.vector_store %arg33[%c0_91, %c0_92, %c0_93], %159 {strides = array<i32>} : memref<1x1x128xf32, #tpu.memory_space<vmem>>, vector<1x1x128xf32>,
    return
  }
  func.func @transform_0(%arg0: i32) -> (i32, i32) {
    %c0_i32 = arith.constant 0 : i32
    %c0_i32_0 = arith.constant 0 : i32
    return %arg0, %c0_i32 : i32, i32
  }
  func.func @transform_1(%arg0: i32) -> (i32, i32) {
    %c0_i32 = arith.constant 0 : i32
    %c0_i32_0 = arith.constant 0 : i32
    return %arg0, %c0_i32 : i32, i32
  }
  func.func @transform_2(%arg0: i32) -> (i32, i32) {
    %c0_i32 = arith.constant 0 : i32
    %c0_i32_0 = arith.constant 0 : i32
    return %arg0, %c0_i32 : i32, i32
  }
  func.func @transform_3(%arg0: i32) -> (i32, i32) {
    %c0_i32 = arith.constant 0 : i32
    %c0_i32_0 = arith.constant 0 : i32
    return %arg0, %c0_i32 : i32, i32
  }
  func.func @transform_4(%arg0: i32) -> (i32, i32) {
    %c0_i32 = arith.constant 0 : i32
    %c0_i32_0 = arith.constant 0 : i32
    %c0_i32_1 = arith.constant 0 : i32
    return %c0_i32, %c0_i32_0 : i32, i32
  }
  func.func @transform_5(%arg0: i32) -> (i32, i32) {
    %c0_i32 = arith.constant 0 : i32
    %c0_i32_0 = arith.constant 0 : i32
    %c0_i32_1 = arith.constant 0 : i32
    return %c0_i32, %c0_i32_0 : i32, i32
  }
  func.func @transform_6(%arg0: i32) -> (i32, i32) {
    %c0_i32 = arith.constant 0 : i32
    %c0_i32_0 = arith.constant 0 : i32
    %c0_i32_1 = arith.constant 0 : i32
    return %c0_i32, %c0_i32_0 : i32, i32
  }
  func.func @transform_7(%arg0: i32) -> (i32, i32) {
    %c0_i32 = arith.constant 0 : i32
    %c0_i32_0 = arith.constant 0 : i32
    %c0_i32_1 = arith.constant 0 : i32
    return %c0_i32, %c0_i32_0 : i32, i32
  }
  func.func @transform_8(%arg0: i32) -> (i32, i32) {
    %c0_i32 = arith.constant 0 : i32
    %c0_i32_0 = arith.constant 0 : i32
    %c0_i32_1 = arith.constant 0 : i32
    return %c0_i32, %c0_i32_0 : i32, i32
  }
  func.func @transform_9(%arg0: i32) -> (i32, i32) {
    %c0_i32 = arith.constant 0 : i32
    %c0_i32_0 = arith.constant 0 : i32
    %c0_i32_1 = arith.constant 0 : i32
    return %c0_i32, %c0_i32_0 : i32, i32
  }
  func.func @transform_10(%arg0: i32) -> (i32, i32) {
    %c0_i32 = arith.constant 0 : i32
    %c0_i32_0 = arith.constant 0 : i32
    %c0_i32_1 = arith.constant 0 : i32
    return %c0_i32, %c0_i32_0 : i32, i32
  }
  func.func @transform_11(%arg0: i32) -> (i32, i32) {
    %c0_i32 = arith.constant 0 : i32
    %c0_i32_0 = arith.constant 0 : i32
    %c0_i32_1 = arith.constant 0 : i32
    return %c0_i32, %c0_i32_0 : i32, i32
  }
  func.func @transform_12(%arg0: i32) -> (i32, i32) {
    %c0_i32 = arith.constant 0 : i32
    %c0_i32_0 = arith.constant 0 : i32
    %c0_i32_1 = arith.constant 0 : i32
    return %c0_i32, %c0_i32_0 : i32, i32
  }
  func.func @transform_13(%arg0: i32) -> (i32, i32) {
    %c0_i32 = arith.constant 0 : i32
    %c0_i32_0 = arith.constant 0 : i32
    %c0_i32_1 = arith.constant 0 : i32
    return %c0_i32, %c0_i32_0 : i32, i32
  }
  func.func @transform_14(%arg0: i32) -> (i32, i32) {
    %c0_i32 = arith.constant 0 : i32
    %c0_i32_0 = arith.constant 0 : i32
    %c0_i32_1 = arith.constant 0 : i32
    return %c0_i32, %c0_i32_0 : i32, i32
  }
  func.func @transform_15(%arg0: i32) -> (i32, i32) {
    %c0_i32 = arith.constant 0 : i32
    %c0_i32_0 = arith.constant 0 : i32
    %c0_i32_1 = arith.constant 0 : i32
    return %c0_i32, %c0_i32_0 : i32, i32
  }
  func.func @transform_16(%arg0: i32) -> (i32, i32) {
    %c0_i32 = arith.constant 0 : i32
    %c0_i32_0 = arith.constant 0 : i32
    %c0_i32_1 = arith.constant 0 : i32
    return %c0_i32, %c0_i32_0 : i32, i32
  }
  func.func @transform_17(%arg0: i32) -> (i32, i32) {
    %c0_i32 = arith.constant 0 : i32
    %c0_i32_0 = arith.constant 0 : i32
    %c0_i32_1 = arith.constant 0 : i32
    return %c0_i32, %c0_i32_0 : i32, i32
  }
  func.func @transform_18(%arg0: i32) -> (i32, i32) {
    %c0_i32 = arith.constant 0 : i32
    %c0_i32_0 = arith.constant 0 : i32
    %c0_i32_1 = arith.constant 0 : i32
    return %c0_i32, %c0_i32_0 : i32, i32
  }
  func.func @transform_19(%arg0: i32) -> (i32, i32) {
    %c0_i32 = arith.constant 0 : i32
    %c0_i32_0 = arith.constant 0 : i32
    %c0_i32_1 = arith.constant 0 : i32
    return %c0_i32, %c0_i32_0 : i32, i32
  }
  func.func @transform_20(%arg0: i32) -> (i32, i32) {
    %c0_i32 = arith.constant 0 : i32
    %c0_i32_0 = arith.constant 0 : i32
    %c0_i32_1 = arith.constant 0 : i32
    return %c0_i32, %c0_i32_0 : i32, i32
  }
  func.func @transform_21(%arg0: i32) -> (i32, i32) {
    %c0_i32 = arith.constant 0 : i32
    %c0_i32_0 = arith.constant 0 : i32
    %c0_i32_1 = arith.constant 0 : i32
    return %c0_i32, %c0_i32_0 : i32, i32
  }
  func.func @transform_22(%arg0: i32) -> (i32, i32) {
    %c0_i32 = arith.constant 0 : i32
    %c0_i32_0 = arith.constant 0 : i32
    %c0_i32_1 = arith.constant 0 : i32
    return %c0_i32, %c0_i32_0 : i32, i32
  }
  func.func @transform_23(%arg0: i32) -> (i32, i32) {
    %c0_i32 = arith.constant 0 : i32
    %c0_i32_0 = arith.constant 0 : i32
    %c0_i32_1 = arith.constant 0 : i32
    return %c0_i32, %c0_i32_0 : i32, i32
  }
  func.func @transform_24(%arg0: i32) -> (i32, i32) {
    %c0_i32 = arith.constant 0 : i32
    %c0_i32_0 = arith.constant 0 : i32
    %c0_i32_1 = arith.constant 0 : i32
    return %c0_i32, %c0_i32_0 : i32, i32
  }
  func.func @transform_25(%arg0: i32) -> (i32, i32) {
    %c0_i32 = arith.constant 0 : i32
    %c0_i32_0 = arith.constant 0 : i32
    %c0_i32_1 = arith.constant 0 : i32
    return %c0_i32, %c0_i32_0 : i32, i32
  }
  func.func @transform_26(%arg0: i32) -> (i32, i32) {
    %c0_i32 = arith.constant 0 : i32
    %c0_i32_0 = arith.constant 0 : i32
    %c0_i32_1 = arith.constant 0 : i32
    return %c0_i32, %c0_i32_0 : i32, i32
  }
  func.func @transform_27(%arg0: i32) -> (i32, i32) {
    %c0_i32 = arith.constant 0 : i32
    %c0_i32_0 = arith.constant 0 : i32
    %c0_i32_1 = arith.constant 0 : i32
    return %c0_i32, %c0_i32_0 : i32, i32
  }
  func.func @transform_28(%arg0: i32) -> (i32, i32) {
    %c0_i32 = arith.constant 0 : i32
    %c0_i32_0 = arith.constant 0 : i32
    %c0_i32_1 = arith.constant 0 : i32
    return %c0_i32, %c0_i32_0 : i32, i32
  }
  func.func @transform_29(%arg0: i32) -> (i32, i32) {
    %c0_i32 = arith.constant 0 : i32
    %c0_i32_0 = arith.constant 0 : i32
    %c0_i32_1 = arith.constant 0 : i32
    return %c0_i32, %c0_i32_0 : i32, i32
  }
  func.func @transform_30(%arg0: i32) -> (i32, i32) {
    %c0_i32 = arith.constant 0 : i32
    %c0_i32_0 = arith.constant 0 : i32
    %c0_i32_1 = arith.constant 0 : i32
    return %c0_i32, %c0_i32_0 : i32, i32
  }
  func.func @transform_31(%arg0: i32) -> (i32, i32) {
    %c0_i32 = arith.constant 0 : i32
    %c0_i32_0 = arith.constant 0 : i32
    %c0_i32_1 = arith.constant 0 : i32
    return %c0_i32, %c0_i32_0 : i32, i32
  }
  func.func @transform_32(%arg0: i32) -> (i32, i32, i32) {
    %c0_i32 = arith.constant 0 : i32
    %c0_i32_0 = arith.constant 0 : i32
    %c0_i32_1 = arith.constant 0 : i32
    return %arg0, %c0_i32, %c0_i32_0 : i32, i32, i32
  }
}

</mosaic_0001>

<llo_original>
// kernel: vq_align_forward.1
$region0: #{vq_align_forward.1}
  #allocation0 [shape = 'u32[]', space=smem, size = 0x4, offset = 0x4, fixed_abs, tag = 'smem constant byte address 0x4 - core index']
  #allocation1 [shape = 'u32[144,128]{1,0:T(1,128)}', space=vmem, size = 0x12000, scoped, tag = 'internal scratch']
  %s0 = inlined_call_operand.smem [shape: u32[33], index: -1, kind: input, shape index: {}]
  %s1 = sld [smem:[%s0]]
  %s2 = scalar_lea.smem %s0, 1
  %s3 = sld [smem:[%s2]]
  %s4 = scalar_lea.smem %s0, 2
  %s5 = sld [smem:[%s4]]
  %s6 = scalar_lea.smem %s0, 3
  %s7 = sld [smem:[%s6]]
  %s8 = scalar_lea.smem %s0, 4
  %s9 = sld [smem:[%s8]]
  %s10 = scalar_lea.smem %s0, 5
  %s11 = sld [smem:[%s10]]
  %s12 = scalar_lea.smem %s0, 6
  %s13 = sld [smem:[%s12]]
  %s14 = scalar_lea.smem %s0, 7
  %s15 = sld [smem:[%s14]]
  %s16 = scalar_lea.smem %s0, 8
  %s17 = sld [smem:[%s16]]
  %s18 = scalar_lea.smem %s0, 9
  %s19 = sld [smem:[%s18]]
  %s20 = scalar_lea.smem %s0, 10
  %s21 = sld [smem:[%s20]]
  %s22 = scalar_lea.smem %s0, 11
  %s23 = sld [smem:[%s22]]
  %s24 = scalar_lea.smem %s0, 12
  %s25 = sld [smem:[%s24]]
  %s26 = scalar_lea.smem %s0, 13
  %s27 = sld [smem:[%s26]]
  %s28 = scalar_lea.smem %s0, 14
  %s29 = sld [smem:[%s28]]
  %s30 = scalar_lea.smem %s0, 15
  %s31 = sld [smem:[%s30]]
  %s32 = scalar_lea.smem %s0, 16
  %s33 = sld [smem:[%s32]]
  %s34 = scalar_lea.smem %s0, 17
  %s35 = sld [smem:[%s34]]
  %s36 = scalar_lea.smem %s0, 18
  %s37 = sld [smem:[%s36]]
  %s38 = scalar_lea.smem %s0, 19
  %s39 = sld [smem:[%s38]]
  %s40 = scalar_lea.smem %s0, 20
  %s41 = sld [smem:[%s40]]
  %s42 = scalar_lea.smem %s0, 21
  %s43 = sld [smem:[%s42]]
  %s44 = scalar_lea.smem %s0, 22
  %s45 = sld [smem:[%s44]]
  %s46 = scalar_lea.smem %s0, 23
  %s47 = sld [smem:[%s46]]
  %s48 = scalar_lea.smem %s0, 24
  %s49 = sld [smem:[%s48]]
  %s50 = scalar_lea.smem %s0, 25
  %s51 = sld [smem:[%s50]]
  %s52 = scalar_lea.smem %s0, 26
  %s53 = sld [smem:[%s52]]
  %s54 = scalar_lea.smem %s0, 27
  %s55 = sld [smem:[%s54]]
  %s56 = scalar_lea.smem %s0, 28
  %s57 = sld [smem:[%s56]]
  %s58 = scalar_lea.smem %s0, 29
  %s59 = sld [smem:[%s58]]
  %s60 = scalar_lea.smem %s0, 30
  %s61 = sld [smem:[%s60]]
  %s62 = scalar_lea.smem %s0, 31
  %s63 = sld [smem:[%s62]]
  %s64 = scalar_lea.smem %s0, 32
  %s65 = sld [smem:[%s64]]
  %s66 = sld [smem:[#allocation0]]
  $region186: #{vq_align_forward.1} parent=0
    _
  %s68 = ssub.s32 1, %s66
  %s69 = scalar_select 0, %s68, %s66
  $region1: #{vq_align_forward.1} parent=0
    #allocation2 [shape = 'u8[32768]{0}', space=vmem, size = 0x8000, scoped, tag = 'input window, operand 4, single buffered']
    #allocation3 [shape = 's32[1]{0}', space=sflag, size = 0x4, scoped, tag = 'scoped memory for vq_align_forward.1']
    #allocation4 [shape = 'u8[32768]{0}', space=vmem, size = 0x8000, scoped, tag = 'input window, operand 6, single buffered']
    #allocation5 [shape = 's32[1]{0}', space=sflag, size = 0x4, scoped, tag = 'scoped memory for vq_align_forward.1']
    #allocation6 [shape = 'u8[32768]{0}', space=vmem, size = 0x8000, scoped, tag = 'input window, operand 8, single buffered']
    #allocation7 [shape = 'u8[32768]{0}', space=vmem, size = 0x8000, scoped, tag = 'input window, operand 10, single buffered']
    #allocation8 [shape = 's32[1]{0}', space=sflag, size = 0x4, scoped, tag = 'scoped memory for vq_align_forward.1']
    #allocation9 [shape = 'u8[32768]{0}', space=vmem, size = 0x8000, scoped, tag = 'input window, operand 12, single buffered']
    #allocation10 [shape = 'u8[32768]{0}', space=vmem, size = 0x8000, scoped, tag = 'input window, operand 14, single buffered']
    #allocation11 [shape = 's32[1]{0}', space=sflag, size = 0x4, scoped, tag = 'scoped memory for vq_align_forward.1']
    #allocation12 [shape = 'u8[32768]{0}', space=vmem, size = 0x8000, scoped, tag = 'input window, operand 16, single buffered']
    #allocation13 [shape = 'u8[32768]{0}', space=vmem, size = 0x8000, scoped, tag = 'input window, operand 18, single buffered']
    #allocation14 [shape = 's32[1]{0}', space=sflag, size = 0x4, scoped, tag = 'scoped memory for vq_align_forward.1']
    #allocation15 [shape = 'u8[32768]{0}', space=vmem, size = 0x8000, scoped, tag = 'input window, operand 20, single buffered']
    #allocation16 [shape = 'u8[32768]{0}', space=vmem, size = 0x8000, scoped, tag = 'input window, operand 24, single buffered']
    #allocation17 [shape = 's32[1]{0}', space=sflag, size = 0x4, scoped, tag = 'scoped memory for vq_align_forward.1']
    #allocation18 [shape = 'u8[32768]{0}', space=vmem, size = 0x8000, scoped, tag = 'input window, operand 26, single buffered']
    #allocation19 [shape = 'u8[32768]{0}', space=vmem, size = 0x8000, scoped, tag = 'input window, operand 28, single buffered']
    #allocation20 [shape = 's32[1]{0}', space=sflag, size = 0x4, scoped, tag = 'scoped memory for vq_align_forward.1']
    %70 = vsyncpa [#allocation3], 0
    %71 = vsyncpa [#allocation5], 0
    %72 = vsyncpa [#allocation8], 0
    %73 = vsyncpa [#allocation11], 0
    %74 = vsyncpa [#allocation14], 0
    %75 = vsyncpa [#allocation17], 0
    %76 = vsyncpa [#allocation20], 0
    // Predicated region
    $region2: #{vq_align_forward.1} parent=1 // pred_check
      _
    $region3: #{vq_align_forward.1} parent=1 // pred_check_branch
      %78 = sbr.rel (0) target = $region5
    $region4: #{vq_align_forward.1} parent=1 // pred_region
      _
    $region5: #{vq_align_forward.1} parent=1 // pred_fallthru
      _
    // Predicated region
    $region6: #{vq_align_forward.1} parent=1 // pred_check
      _
    $region7: #{vq_align_forward.1} parent=1 // pred_check_branch
      %80 = sbr.rel (0) target = $region9
    $region8: #{vq_align_forward.1} parent=1 // pred_region
      _
    $region9: #{vq_align_forward.1} parent=1 // pred_fallthru
      _
    // Predicated region
    $region10: #{vq_align_forward.1} parent=1 // pred_check
      _
    $region11: #{vq_align_forward.1} parent=1 // pred_check_branch
      %82 = sbr.rel (0) target = $region13
    $region12: #{vq_align_forward.1} parent=1 // pred_region
      _
    $region13: #{vq_align_forward.1} parent=1 // pred_fallthru
      _
    // Predicated region
    $region14: #{vq_align_forward.1} parent=1 // pred_check
      _
    $region15: #{vq_align_forward.1} parent=1 // pred_check_branch
      %84 = sbr.rel (0) target = $region17
    $region16: #{vq_align_forward.1} parent=1 // pred_region
      _
    $region17: #{vq_align_forward.1} parent=1 // pred_fallthru
      _
    // Predicated region
    $region18: #{vq_align_forward.1} parent=1 // pred_check
      _
    $region19: #{vq_align_forward.1} parent=1 // pred_check_branch
      %86 = sbr.rel (0) target = $region21
    $region20: #{vq_align_forward.1} parent=1 // pred_region
      %s88 = ssub.s32 1024, 1024
      %89 = vsyncadd [#allocation3], %s88
      %s90 = sshll.u32 [#allocation2], 4
      %s91 = int_to_ptr.vmem [resolvable:$true] %s90
      %96 = dma.hbm_to_vmem [thread:$0]  %s9, 1024, %s91, [#allocation3], 64, 64, 4
    $region21: #{vq_align_forward.1} parent=1 // pred_fallthru
      _
    // Predicated region
    $region22: #{vq_align_forward.1} parent=1 // pred_check
      _
    $region23: #{vq_align_forward.1} parent=1 // pred_check_branch
      %98 = sbr.rel (0) target = $region25
    $region24: #{vq_align_forward.1} parent=1 // pred_region
      _
    $region25: #{vq_align_forward.1} parent=1 // pred_fallthru
      _
    // Predicated region
    $region26: #{vq_align_forward.1} parent=1 // pred_check
      _
    $region27: #{vq_align_forward.1} parent=1 // pred_check_branch
      %100 = sbr.rel (0) target = $region29
    $region28: #{vq_align_forward.1} parent=1 // pred_region
      %s102 = ssub.s32 1024, 1024
      %103 = vsyncadd [#allocation5], %s102
      %s104 = sshll.u32 [#allocation4], 4
      %s105 = int_to_ptr.vmem [resolvable:$true] %s104
      %110 = dma.hbm_to_vmem [thread:$0]  %s13, 1024, %s105, [#allocation5], 64, 64, 4
    $region29: #{vq_align_forward.1} parent=1 // pred_fallthru
      _
    // Predicated region
    $region30: #{vq_align_forward.1} parent=1 // pred_check
      _
    $region31: #{vq_align_forward.1} parent=1 // pred_check_branch
      %112 = sbr.rel (0) target = $region33
    $region32: #{vq_align_forward.1} parent=1 // pred_region
      _
    $region33: #{vq_align_forward.1} parent=1 // pred_fallthru
      _
    // Predicated region
    $region34: #{vq_align_forward.1} parent=1 // pred_check
      _
    $region35: #{vq_align_forward.1} parent=1 // pred_check_branch
      %114 = sbr.rel (0) target = $region37
    $region36: #{vq_align_forward.1} parent=1 // pred_region
      %s116 = ssub.s32 1024, 1024
      %117 = vsyncadd [#allocation5], %s116
      %s118 = sshll.u32 [#allocation6], 4
      %s119 = int_to_ptr.vmem [resolvable:$true] %s118
      %124 = dma.hbm_to_vmem [thread:$0]  %s17, 1024, %s119, [#allocation5], 64, 64, 4
    $region37: #{vq_align_forward.1} parent=1 // pred_fallthru
      _
    // Predicated region
    $region38: #{vq_align_forward.1} parent=1 // pred_check
      _
    $region39: #{vq_align_forward.1} parent=1 // pred_check_branch
      %126 = sbr.rel (0) target = $region41
    $region40: #{vq_align_forward.1} parent=1 // pred_region
      _
    $region41: #{vq_align_forward.1} parent=1 // pred_fallthru
      _
    // Predicated region
    $region42: #{vq_align_forward.1} parent=1 // pred_check
      _
    $region43: #{vq_align_forward.1} parent=1 // pred_check_branch
      %128 = sbr.rel (0) target = $region45
    $region44: #{vq_align_forward.1} parent=1 // pred_region
      %s130 = ssub.s32 1024, 1024
      %131 = vsyncadd [#allocation8], %s130
      %s132 = sshll.u32 [#allocation7], 4
      %s133 = int_to_ptr.vmem [resolvable:$true] %s132
      %138 = dma.hbm_to_vmem [thread:$0]  %s21, 1024, %s133, [#allocation8], 64, 64, 4
    $region45: #{vq_align_forward.1} parent=1 // pred_fallthru
      _
    // Predicated region
    $region46: #{vq_align_forward.1} parent=1 // pred_check
      _
    $region47: #{vq_align_forward.1} parent=1 // pred_check_branch
      %140 = sbr.rel (0) target = $region49
    $region48: #{vq_align_forward.1} parent=1 // pred_region
      _
    $region49: #{vq_align_forward.1} parent=1 // pred_fallthru
      _
    // Predicated region
    $region50: #{vq_align_forward.1} parent=1 // pred_check
      _
    $region51: #{vq_align_forward.1} parent=1 // pred_check_branch
      %142 = sbr.rel (0) target = $region53
    $region52: #{vq_align_forward.1} parent=1 // pred_region
      %s144 = ssub.s32 1024, 1024
      %145 = vsyncadd [#allocation8], %s144
      %s146 = sshll.u32 [#allocation9], 4
      %s147 = int_to_ptr.vmem [resolvable:$true] %s146
      %152 = dma.hbm_to_vmem [thread:$0]  %s25, 1024, %s147, [#allocation8], 64, 64, 4
    $region53: #{vq_align_forward.1} parent=1 // pred_fallthru
      _
    // Predicated region
    $region54: #{vq_align_forward.1} parent=1 // pred_check
      _
    $region55: #{vq_align_forward.1} parent=1 // pred_check_branch
      %154 = sbr.rel (0) target = $region57
    $region56: #{vq_align_forward.1} parent=1 // pred_region
      _
    $region57: #{vq_align_forward.1} parent=1 // pred_fallthru
      _
    // Predicated region
    $region58: #{vq_align_forward.1} parent=1 // pred_check
      _
    $region59: #{vq_align_forward.1} parent=1 // pred_check_branch
      %156 = sbr.rel (0) target = $region61
    $region60: #{vq_align_forward.1} parent=1 // pred_region
      %s158 = ssub.s32 1024, 1024
      %159 = vsyncadd [#allocation11], %s158
      %s160 = sshll.u32 [#allocation10], 4
      %s161 = int_to_ptr.vmem [resolvable:$true] %s160
      %166 = dma.hbm_to_vmem [thread:$0]  %s29, 1024, %s161, [#allocation11], 64, 64, 4
    $region61: #{vq_align_forward.1} parent=1 // pred_fallthru
      _
    // Predicated region
    $region62: #{vq_align_forward.1} parent=1 // pred_check
      _
    $region63: #{vq_align_forward.1} parent=1 // pred_check_branch
      %168 = sbr.rel (0) target = $region65
    $region64: #{vq_align_forward.1} parent=1 // pred_region
      _
    $region65: #{vq_align_forward.1} parent=1 // pred_fallthru
      _
    // Predicated region
    $region66: #{vq_align_forward.1} parent=1 // pred_check
      _
    $region67: #{vq_align_forward.1} parent=1 // pred_check_branch
      %170 = sbr.rel (0) target = $region69
    $region68: #{vq_align_forward.1} parent=1 // pred_region
      %s172 = ssub.s32 1024, 1024
      %173 = vsyncadd [#allocation11], %s172
      %s174 = sshll.u32 [#allocation12], 4
      %s175 = int_to_ptr.vmem [resolvable:$true] %s174
      %180 = dma.hbm_to_vmem [thread:$0]  %s33, 1024, %s175, [#allocation11], 64, 64, 4
    $region69: #{vq_align_forward.1} parent=1 // pred_fallthru
      _
    // Predicated region
    $region70: #{vq_align_forward.1} parent=1 // pred_check
      _
    $region71: #{vq_align_forward.1} parent=1 // pred_check_branch
      %182 = sbr.rel (0) target = $region73
    $region72: #{vq_align_forward.1} parent=1 // pred_region
      _
    $region73: #{vq_align_forward.1} parent=1 // pred_fallthru
      _
    // Predicated region
    $region74: #{vq_align_forward.1} parent=1 // pred_check
      _
    $region75: #{vq_align_forward.1} parent=1 // pred_check_branch
      %184 = sbr.rel (0) target = $region77
    $region76: #{vq_align_forward.1} parent=1 // pred_region
      %s186 = ssub.s32 1024, 1024
      %187 = vsyncadd [#allocation14], %s186
      %s188 = sshll.u32 [#allocation13], 4
      %s189 = int_to_ptr.vmem [resolvable:$true] %s188
      %194 = dma.hbm_to_vmem [thread:$0]  %s37, 1024, %s189, [#allocation14], 64, 64, 4
    $region77: #{vq_align_forward.1} parent=1 // pred_fallthru
      _
    // Predicated region
    $region78: #{vq_align_forward.1} parent=1 // pred_check
      _
    $region79: #{vq_align_forward.1} parent=1 // pred_check_branch
      %196 = sbr.rel (0) target = $region81
    $region80: #{vq_align_forward.1} parent=1 // pred_region
      _
    $region81: #{vq_align_forward.1} parent=1 // pred_fallthru
      _
    // Predicated region
    $region82: #{vq_align_forward.1} parent=1 // pred_check
      _
    $region83: #{vq_align_forward.1} parent=1 // pred_check_branch
      %198 = sbr.rel (0) target = $region85
    $region84: #{vq_align_forward.1} parent=1 // pred_region
      %s200 = ssub.s32 1024, 1024
      %201 = vsyncadd [#allocation14], %s200
      %s202 = sshll.u32 [#allocation15], 4
      %s203 = int_to_ptr.vmem [resolvable:$true] %s202
      %208 = dma.hbm_to_vmem [thread:$0]  %s41, 1024, %s203, [#allocation14], 64, 64, 4
    $region85: #{vq_align_forward.1} parent=1 // pred_fallthru
      _
    // Predicated region
    $region86: #{vq_align_forward.1} parent=1 // pred_check
      _
    $region87: #{vq_align_forward.1} parent=1 // pred_check_branch
      %210 = sbr.rel (0) target = $region89
    $region88: #{vq_align_forward.1} parent=1 // pred_region
      _
    $region89: #{vq_align_forward.1} parent=1 // pred_fallthru
      _
    // Predicated region
    $region90: #{vq_align_forward.1} parent=1 // pred_check
      _
    $region91: #{vq_align_forward.1} parent=1 // pred_check_branch
      %212 = sbr.rel (0) target = $region93
    $region92: #{vq_align_forward.1} parent=1 // pred_region
      _
    $region93: #{vq_align_forward.1} parent=1 // pred_fallthru
      _
    // Predicated region
    $region94: #{vq_align_forward.1} parent=1 // pred_check
      _
    $region95: #{vq_align_forward.1} parent=1 // pred_check_branch
      %214 = sbr.rel (0) target = $region97
    $region96: #{vq_align_forward.1} parent=1 // pred_region
      _
    $region97: #{vq_align_forward.1} parent=1 // pred_fallthru
      _
    // Predicated region
    $region98: #{vq_align_forward.1} parent=1 // pred_check
      _
    $region99: #{vq_align_forward.1} parent=1 // pred_check_branch
      %216 = sbr.rel (0) target = $region101
    $region100: #{vq_align_forward.1} parent=1 // pred_region
      %s218 = ssub.s32 1024, 1024
      %219 = vsyncadd [#allocation17], %s218
      %s220 = sshll.u32 [#allocation16], 4
      %s221 = int_to_ptr.vmem [resolvable:$true] %s220
      %226 = dma.hbm_to_vmem [thread:$0]  %s49, 1024, %s221, [#allocation17], 64, 64, 4
    $region101: #{vq_align_forward.1} parent=1 // pred_fallthru
      _
    // Predicated region
    $region102: #{vq_align_forward.1} parent=1 // pred_check
      _
    $region103: #{vq_align_forward.1} parent=1 // pred_check_branch
      %228 = sbr.rel (0) target = $region105
    $region104: #{vq_align_forward.1} parent=1 // pred_region
      _
    $region105: #{vq_align_forward.1} parent=1 // pred_fallthru
      _
    // Predicated region
    $region106: #{vq_align_forward.1} parent=1 // pred_check
      _
    $region107: #{vq_align_forward.1} parent=1 // pred_check_branch
      %230 = sbr.rel (0) target = $region109
    $region108: #{vq_align_forward.1} parent=1 // pred_region
      %s232 = ssub.s32 1024, 1024
      %233 = vsyncadd [#allocation17], %s232
      %s234 = sshll.u32 [#allocation18], 4
      %s235 = int_to_ptr.vmem [resolvable:$true] %s234
      %240 = dma.hbm_to_vmem [thread:$0]  %s53, 1024, %s235, [#allocation17], 64, 64, 4
    $region109: #{vq_align_forward.1} parent=1 // pred_fallthru
      _
    // Predicated region
    $region110: #{vq_align_forward.1} parent=1 // pred_check
      _
    $region111: #{vq_align_forward.1} parent=1 // pred_check_branch
      %242 = sbr.rel (0) target = $region113
    $region112: #{vq_align_forward.1} parent=1 // pred_region
      _
    $region113: #{vq_align_forward.1} parent=1 // pred_fallthru
      _
    // Predicated region
    $region114: #{vq_align_forward.1} parent=1 // pred_check
      _
    $region115: #{vq_align_forward.1} parent=1 // pred_check_branch
      %244 = sbr.rel (0) target = $region117
    $region116: #{vq_align_forward.1} parent=1 // pred_region
      %s246 = ssub.s32 1024, 1024
      %247 = vsyncadd [#allocation20], %s246
      %s248 = sshll.u32 [#allocation19], 4
      %s249 = int_to_ptr.vmem [resolvable:$true] %s248
      %254 = dma.hbm_to_vmem [thread:$0]  %s57, 1024, %s249, [#allocation20], 64, 64, 4
    $region117: #{vq_align_forward.1} parent=1 // pred_fallthru
      _
    // Predicated region
    $region118: #{vq_align_forward.1} parent=1 // pred_check
      _
    $region119: #{vq_align_forward.1} parent=1 // pred_check_branch
      %256 = sbr.rel (0) target = $region121
    $region120: #{vq_align_forward.1} parent=1 // pred_region
      _
    $region121: #{vq_align_forward.1} parent=1 // pred_fallthru
      _
    // Predicated region
    $region122: #{vq_align_forward.1} parent=1 // pred_check
      _
    $region123: #{vq_align_forward.1} parent=1 // pred_check_branch
      %258 = sbr.rel (0) target = $region125
    $region124: #{vq_align_forward.1} parent=1 // pred_region
      _
    $region125: #{vq_align_forward.1} parent=1 // pred_fallthru
      _
    // Predicated region
    $region126: #{vq_align_forward.1} parent=1 // pred_check
      _
    $region127: #{vq_align_forward.1} parent=1 // pred_check_branch
      %260 = sbr.rel (0) target = $region129
    $region128: #{vq_align_forward.1} parent=1 // pred_region
      _
    $region129: #{vq_align_forward.1} parent=1 // pred_fallthru
      _
    // Predicated region
    $region130: #{vq_align_forward.1} parent=1 // pred_check
      _
    $region131: #{vq_align_forward.1} parent=1 // pred_check_branch
      %262 = sbr.rel (0) target = $region133
    $region132: #{vq_align_forward.1} parent=1 // pred_region
      %263 = dma.done [#allocation3], 1024
    $region133: #{vq_align_forward.1} parent=1 // pred_fallthru
      _
    // Predicated region
    $region134: #{vq_align_forward.1} parent=1 // pred_check
      _
    $region135: #{vq_align_forward.1} parent=1 // pred_check_branch
      %265 = sbr.rel (0) target = $region137
    $region136: #{vq_align_forward.1} parent=1 // pred_region
      %266 = dma.done [#allocation5], 1024
    $region137: #{vq_align_forward.1} parent=1 // pred_fallthru
      _
    // Predicated region
    $region138: #{vq_align_forward.1} parent=1 // pred_check
      _
    $region139: #{vq_align_forward.1} parent=1 // pred_check_branch
      %268 = sbr.rel (0) target = $region141
    $region140: #{vq_align_forward.1} parent=1 // pred_region
      %269 = dma.done [#allocation5], 1024
    $region141: #{vq_align_forward.1} parent=1 // pred_fallthru
      _
    // Predicated region
    $region142: #{vq_align_forward.1} parent=1 // pred_check
      _
    $region143: #{vq_align_forward.1} parent=1 // pred_check_branch
      %271 = sbr.rel (0) target = $region145
    $region144: #{vq_align_forward.1} parent=1 // pred_region
      %272 = dma.done [#allocation8], 1024
    $region145: #{vq_align_forward.1} parent=1 // pred_fallthru
      _
    // Predicated region
    $region146: #{vq_align_forward.1} parent=1 // pred_check
      _
    $region147: #{vq_align_forward.1} parent=1 // pred_check_branch
      %274 = sbr.rel (0) target = $region149
    $region148: #{vq_align_forward.1} parent=1 // pred_region
      %275 = dma.done [#allocation8], 1024
    $region149: #{vq_align_forward.1} parent=1 // pred_fallthru
      _
    // Predicated region
    $region150: #{vq_align_forward.1} parent=1 // pred_check
      _
    $region151: #{vq_align_forward.1} parent=1 // pred_check_branch
      %277 = sbr.rel (0) target = $region153
    $region152: #{vq_align_forward.1} parent=1 // pred_region
      %278 = dma.done [#allocation11], 1024
    $region153: #{vq_align_forward.1} parent=1 // pred_fallthru
      _
    // Predicated region
    $region154: #{vq_align_forward.1} parent=1 // pred_check
      _
    $region155: #{vq_align_forward.1} parent=1 // pred_check_branch
      %280 = sbr.rel (0) target = $region157
    $region156: #{vq_align_forward.1} parent=1 // pred_region
      %281 = dma.done [#allocation11], 1024
    $region157: #{vq_align_forward.1} parent=1 // pred_fallthru
      _
    // Predicated region
    $region158: #{vq_align_forward.1} parent=1 // pred_check
      _
    $region159: #{vq_align_forward.1} parent=1 // pred_check_branch
      %283 = sbr.rel (0) target = $region161
    $region160: #{vq_align_forward.1} parent=1 // pred_region
      %284 = dma.done [#allocation14], 1024
    $region161: #{vq_align_forward.1} parent=1 // pred_fallthru
      _
    // Predicated region
    $region162: #{vq_align_forward.1} parent=1 // pred_check
      _
    $region163: #{vq_align_forward.1} parent=1 // pred_check_branch
      %286 = sbr.rel (0) target = $region165
    $region164: #{vq_align_forward.1} parent=1 // pred_region
      %287 = dma.done [#allocation14], 1024
    $region165: #{vq_align_forward.1} parent=1 // pred_fallthru
      _
    // Predicated region
    $region166: #{vq_align_forward.1} parent=1 // pred_check
      _
    $region167: #{vq_align_forward.1} parent=1 // pred_check_branch
      %289 = sbr.rel (0) target = $region169
    $region168: #{vq_align_forward.1} parent=1 // pred_region
      %290 = dma.done [#allocation17], 1024
    $region169: #{vq_align_forward.1} parent=1 // pred_fallthru
      _
    // Predicated region
    $region170: #{vq_align_forward.1} parent=1 // pred_check
      _
    $region171: #{vq_align_forward.1} parent=1 // pred_check_branch
      %292 = sbr.rel (0) target = $region173
    $region172: #{vq_align_forward.1} parent=1 // pred_region
      %293 = dma.done [#allocation17], 1024
    $region173: #{vq_align_forward.1} parent=1 // pred_fallthru
      _
    // Predicated region
    $region174: #{vq_align_forward.1} parent=1 // pred_check
      _
    $region175: #{vq_align_forward.1} parent=1 // pred_check_branch
      %295 = sbr.rel (0) target = $region177
    $region176: #{vq_align_forward.1} parent=1 // pred_region
      %296 = dma.done [#allocation20], 1024
    $region177: #{vq_align_forward.1} parent=1 // pred_fallthru
      _
    %v298 = vld [vmem:[%s1] sm:$0xf]
    %v299 = vld [vmem:[%s1 + $0x4] sm:$0xf]
    %v300 = vld [vmem:[#allocation2] sm:$0xf]
    %v301 = vld [vmem:[#allocation2 + $0x4] sm:$0xf]
    %v302 = vld [vmem:[#allocation2 + $0x8] sm:$0xf]
    %v303 = vld [vmem:[#allocation2 + $0xc] sm:$0xf]
    %v304 = vld [vmem:[#allocation2 + $0x10] sm:$0xf]
    %v305 = vld [vmem:[#allocation2 + $0x14] sm:$0xf]
    %v306 = vld [vmem:[#allocation2 + $0x18] sm:$0xf]
    %v307 = vld [vmem:[#allocation2 + $0x1c] sm:$0xf]
    %v308 = vld [vmem:[#allocation2 + $0x20] sm:$0xf]
    %v309 = vld [vmem:[#allocation2 + $0x24] sm:$0xf]
    %v310 = vld [vmem:[#allocation2 + $0x28] sm:$0xf]
    %v311 = vld [vmem:[#allocation2 + $0x2c] sm:$0xf]
    %v312 = vld [vmem:[#allocation2 + $0x30] sm:$0xf]
    %v313 = vld [vmem:[#allocation2 + $0x34] sm:$0xf]
    %v314 = vld [vmem:[#allocation2 + $0x38] sm:$0xf]
    %v315 = vld [vmem:[#allocation2 + $0x3c] sm:$0xf]
    %v316 = vld [vmem:[%s11] sm:$0x1]
    %v318 = vlaneseq
    %v319 = vshrl.u32 %v318, 7
    %v320 = vsub.s32 0, %v319
    %v321 = vrot.slane %v316, %v320
    %v325 = vunpack.c.l.b16 %v298
    %v326 = vunpack.c.l.b16 %v299
    %v327 = vpack.c.b16 %v326, %v325
    %v345 = vunpack.c.l.b16 %v300
    %v346 = vunpack.c.l.b16 %v301
    %v347 = vunpack.c.l.b16 %v302
    %v348 = vunpack.c.l.b16 %v303
    %v349 = vunpack.c.l.b16 %v304
    %v350 = vunpack.c.l.b16 %v305
    %v351 = vunpack.c.l.b16 %v306
    %v352 = vunpack.c.l.b16 %v307
    %v353 = vunpack.c.l.b16 %v308
    %v354 = vunpack.c.l.b16 %v309
    %v355 = vunpack.c.l.b16 %v310
    %v356 = vunpack.c.l.b16 %v311
    %v357 = vunpack.c.l.b16 %v312
    %v358 = vunpack.c.l.b16 %v313
    %v359 = vunpack.c.l.b16 %v314
    %v360 = vunpack.c.l.b16 %v315
    %v361 = vpack.c.b16 %v346, %v345
    %v362 = vpack.c.b16 %v348, %v347
    %v363 = vpack.c.b16 %v350, %v349
    %v364 = vpack.c.b16 %v352, %v351
    %v365 = vpack.c.b16 %v354, %v353
    %v366 = vpack.c.b16 %v356, %v355
    %v367 = vpack.c.b16 %v358, %v357
    %v368 = vpack.c.b16 %v360, %v359
    %377 = vmatprep.subr.bf16.mxu0 0
    %378 = vmatpush1.bf16.msra.mxu0 %v368
    %379 = vmatprep.subr.bf16.mxu0 0
    %380 = vmatpush1.bf16.msra.mxu0 %v367
    %381 = vmatprep.subr.bf16.mxu0 0
    %382 = vmatpush1.bf16.msra.mxu0 %v366
    %383 = vmatprep.subr.bf16.mxu0 0
    %384 = vmatpush1.bf16.msra.mxu0 %v365
    %385 = vmatprep.subr.bf16.mxu0 0
    %386 = vmatpush1.bf16.msra.mxu0 %v364
    %387 = vmatprep.subr.bf16.mxu0 0
    %388 = vmatpush1.bf16.msra.mxu0 %v363
    %389 = vmatprep.subr.bf16.mxu0 0
    %390 = vmatpush1.bf16.msra.mxu0 %v362
    %391 = vmatprep.subr.bf16.mxu0 0
    %392 = vmatpush1.bf16.msra.mxu0 %v361
    %393 = vmatprep.subr.bf16.mxu0 0
    %394 = vmatpush2.bf16.msra.mxu0 0
    %395 = vmatprep.subr.bf16.mxu0 0
    %396 = vmatpush2.bf16.msra.mxu0 0
    %397 = vmatprep.subr.bf16.mxu0 0
    %398 = vmatpush2.bf16.msra.mxu0 0
    %399 = vmatprep.subr.bf16.mxu0 0
    %400 = vmatpush2.bf16.msra.mxu0 0
    %401 = vmatprep.subr.bf16.mxu0 0
    %402 = vmatpush2.bf16.msra.mxu0 0
    %403 = vmatprep.subr.bf16.mxu0 0
    %404 = vmatpush2.bf16.msra.mxu0 0
    %405 = vmatprep.subr.bf16.mxu0 0
    %406 = vmatpush2.bf16.msra.mxu0 0
    %407 = vmatprep.subr.bf16.mxu0 0
    %408 = vmatpush2.bf16.msra.mxu0 0
    %409 = vmatprep.mubr.bf16.mxu0 0
    %410 = vmatmul.mubr.bf16.gmra.mxu0 %v327
    %v411 = vpop.f32.mrf.mxu0
    %v412 = vadd.f32 %v321, %v411
    %v413 = vpop.f32.mrf.mxu0
    %v414 = vpop.f32.mrf.mxu0
    %v415 = vadd.f32 %v321, %v414
    %v416 = vpop.f32.mrf.mxu0
    %417 = vdwg.mxu0
    %v418 = vpack.c.bf16 %v415, %v412
    %v419 = vld [vmem:[#allocation4] sm:$0xf]
    %v420 = vld [vmem:[#allocation4 + $0x4] sm:$0xf]
    %v421 = vld [vmem:[#allocation4 + $0x8] sm:$0xf]
    %v422 = vld [vmem:[#allocation4 + $0xc] sm:$0xf]
    %v423 = vld [vmem:[#allocation4 + $0x10] sm:$0xf]
    %v424 = vld [vmem:[#allocation4 + $0x14] sm:$0xf]
    %v425 = vld [vmem:[#allocation4 + $0x18] sm:$0xf]
    %v426 = vld [vmem:[#allocation4 + $0x1c] sm:$0xf]
    %v427 = vld [vmem:[#allocation4 + $0x20] sm:$0xf]
    %v428 = vld [vmem:[#allocation4 + $0x24] sm:$0xf]
    %v429 = vld [vmem:[#allocation4 + $0x28] sm:$0xf]
    %v430 = vld [vmem:[#allocation4 + $0x2c] sm:$0xf]
    %v431 = vld [vmem:[#allocation4 + $0x30] sm:$0xf]
    %v432 = vld [vmem:[#allocation4 + $0x34] sm:$0xf]
    %v433 = vld [vmem:[#allocation4 + $0x38] sm:$0xf]
    %v434 = vld [vmem:[#allocation4 + $0x3c] sm:$0xf]
    %v435 = vld [vmem:[%s15] sm:$0x1]
    %v437 = vlaneseq
    %v438 = vshrl.u32 %v437, 7
    %v439 = vsub.s32 0, %v438
    %v440 = vrot.slane %v435, %v439
    %v458 = vunpack.c.l.b16 %v419
    %v459 = vunpack.c.l.b16 %v420
    %v460 = vunpack.c.l.b16 %v421
    %v461 = vunpack.c.l.b16 %v422
    %v462 = vunpack.c.l.b16 %v423
    %v463 = vunpack.c.l.b16 %v424
    %v464 = vunpack.c.l.b16 %v425
    %v465 = vunpack.c.l.b16 %v426
    %v466 = vunpack.c.l.b16 %v427
    %v467 = vunpack.c.l.b16 %v428
    %v468 = vunpack.c.l.b16 %v429
    %v469 = vunpack.c.l.b16 %v430
    %v470 = vunpack.c.l.b16 %v431
    %v471 = vunpack.c.l.b16 %v432
    %v472 = vunpack.c.l.b16 %v433
    %v473 = vunpack.c.l.b16 %v434
    %v474 = vpack.c.b16 %v459, %v458
    %v475 = vpack.c.b16 %v461, %v460
    %v476 = vpack.c.b16 %v463, %v462
    %v477 = vpack.c.b16 %v465, %v464
    %v478 = vpack.c.b16 %v467, %v466
    %v479 = vpack.c.b16 %v469, %v468
    %v480 = vpack.c.b16 %v471, %v470
    %v481 = vpack.c.b16 %v473, %v472
    %490 = vmatprep.subr.bf16.mxu0 0
    %491 = vmatpush1.bf16.msra.mxu0 %v481
    %492 = vmatprep.subr.bf16.mxu0 0
    %493 = vmatpush1.bf16.msra.mxu0 %v480
    %494 = vmatprep.subr.bf16.mxu0 0
    %495 = vmatpush1.bf16.msra.mxu0 %v479
    %496 = vmatprep.subr.bf16.mxu0 0
    %497 = vmatpush1.bf16.msra.mxu0 %v478
    %498 = vmatprep.subr.bf16.mxu0 0
    %499 = vmatpush1.bf16.msra.mxu0 %v477
    %500 = vmatprep.subr.bf16.mxu0 0
    %501 = vmatpush1.bf16.msra.mxu0 %v476
    %502 = vmatprep.subr.bf16.mxu0 0
    %503 = vmatpush1.bf16.msra.mxu0 %v475
    %504 = vmatprep.subr.bf16.mxu0 0
    %505 = vmatpush1.bf16.msra.mxu0 %v474
    %506 = vmatprep.subr.bf16.mxu0 0
    %507 = vmatpush2.bf16.msra.mxu0 0
    %508 = vmatprep.subr.bf16.mxu0 0
    %509 = vmatpush2.bf16.msra.mxu0 0
    %510 = vmatprep.subr.bf16.mxu0 0
    %511 = vmatpush2.bf16.msra.mxu0 0
    %512 = vmatprep.subr.bf16.mxu0 0
    %513 = vmatpush2.bf16.msra.mxu0 0
    %514 = vmatprep.subr.bf16.mxu0 0
    %515 = vmatpush2.bf16.msra.mxu0 0
    %516 = vmatprep.subr.bf16.mxu0 0
    %517 = vmatpush2.bf16.msra.mxu0 0
    %518 = vmatprep.subr.bf16.mxu0 0
    %519 = vmatpush2.bf16.msra.mxu0 0
    %520 = vmatprep.subr.bf16.mxu0 0
    %521 = vmatpush2.bf16.msra.mxu0 0
    %522 = vmatprep.mubr.bf16.mxu0 0
    %523 = vmatmul.mubr.bf16.gmra.mxu0 %v418
    %v524 = vpop.f32.mrf.mxu0
    %v525 = vadd.f32 %v440, %v524
    %v526 = vpop.f32.mrf.mxu0
    %v527 = vpop.f32.mrf.mxu0
    %v528 = vadd.f32 %v440, %v527
    %v529 = vpop.f32.mrf.mxu0
    %530 = vdwg.mxu0
    %v531 = vtanh.pop %v525
    %v532 = vtanh.pop %v528
    %v533 = vpack.c.bf16 %v532, %v531
    %v534 = vld [vmem:[#allocation6] sm:$0xf]
    %v535 = vld [vmem:[#allocation6 + $0x4] sm:$0xf]
    %v536 = vld [vmem:[#allocation6 + $0x8] sm:$0xf]
    %v537 = vld [vmem:[#allocation6 + $0xc] sm:$0xf]
    %v538 = vld [vmem:[#allocation6 + $0x10] sm:$0xf]
    %v539 = vld [vmem:[#allocation6 + $0x14] sm:$0xf]
    %v540 = vld [vmem:[#allocation6 + $0x18] sm:$0xf]
    %v541 = vld [vmem:[#allocation6 + $0x1c] sm:$0xf]
    %v542 = vld [vmem:[#allocation6 + $0x20] sm:$0xf]
    %v543 = vld [vmem:[#allocation6 + $0x24] sm:$0xf]
    %v544 = vld [vmem:[#allocation6 + $0x28] sm:$0xf]
    %v545 = vld [vmem:[#allocation6 + $0x2c] sm:$0xf]
    %v546 = vld [vmem:[#allocation6 + $0x30] sm:$0xf]
    %v547 = vld [vmem:[#allocation6 + $0x34] sm:$0xf]
    %v548 = vld [vmem:[#allocation6 + $0x38] sm:$0xf]
    %v549 = vld [vmem:[#allocation6 + $0x3c] sm:$0xf]
    %v550 = vld [vmem:[%s19] sm:$0x1]
    %v552 = vlaneseq
    %v553 = vshrl.u32 %v552, 7
    %v554 = vsub.s32 0, %v553
    %v555 = vrot.slane %v550, %v554
    %v573 = vunpack.c.l.b16 %v534
    %v574 = vunpack.c.l.b16 %v535
    %v575 = vunpack.c.l.b16 %v536
    %v576 = vunpack.c.l.b16 %v537
    %v577 = vunpack.c.l.b16 %v538
    %v578 = vunpack.c.l.b16 %v539
    %v579 = vunpack.c.l.b16 %v540
    %v580 = vunpack.c.l.b16 %v541
    %v581 = vunpack.c.l.b16 %v542
    %v582 = vunpack.c.l.b16 %v543
    %v583 = vunpack.c.l.b16 %v544
    %v584 = vunpack.c.l.b16 %v545
    %v585 = vunpack.c.l.b16 %v546
    %v586 = vunpack.c.l.b16 %v547
    %v587 = vunpack.c.l.b16 %v548
    %v588 = vunpack.c.l.b16 %v549
    %v589 = vpack.c.b16 %v574, %v573
    %v590 = vpack.c.b16 %v576, %v575
    %v591 = vpack.c.b16 %v578, %v577
    %v592 = vpack.c.b16 %v580, %v579
    %v593 = vpack.c.b16 %v582, %v581
    %v594 = vpack.c.b16 %v584, %v583
    %v595 = vpack.c.b16 %v586, %v585
    %v596 = vpack.c.b16 %v588, %v587
    %605 = vmatprep.subr.bf16.mxu0 0
    %606 = vmatpush1.bf16.msra.mxu0 %v596
    %607 = vmatprep.subr.bf16.mxu0 0
    %608 = vmatpush1.bf16.msra.mxu0 %v595
    %609 = vmatprep.subr.bf16.mxu0 0
    %610 = vmatpush1.bf16.msra.mxu0 %v594
    %611 = vmatprep.subr.bf16.mxu0 0
    %612 = vmatpush1.bf16.msra.mxu0 %v593
    %613 = vmatprep.subr.bf16.mxu0 0
    %614 = vmatpush1.bf16.msra.mxu0 %v592
    %615 = vmatprep.subr.bf16.mxu0 0
    %616 = vmatpush1.bf16.msra.mxu0 %v591
    %617 = vmatprep.subr.bf16.mxu0 0
    %618 = vmatpush1.bf16.msra.mxu0 %v590
    %619 = vmatprep.subr.bf16.mxu0 0
    %620 = vmatpush1.bf16.msra.mxu0 %v589
    %621 = vmatprep.subr.bf16.mxu0 0
    %622 = vmatpush2.bf16.msra.mxu0 0
    %623 = vmatprep.subr.bf16.mxu0 0
    %624 = vmatpush2.bf16.msra.mxu0 0
    %625 = vmatprep.subr.bf16.mxu0 0
    %626 = vmatpush2.bf16.msra.mxu0 0
    %627 = vmatprep.subr.bf16.mxu0 0
    %628 = vmatpush2.bf16.msra.mxu0 0
    %629 = vmatprep.subr.bf16.mxu0 0
    %630 = vmatpush2.bf16.msra.mxu0 0
    %631 = vmatprep.subr.bf16.mxu0 0
    %632 = vmatpush2.bf16.msra.mxu0 0
    %633 = vmatprep.subr.bf16.mxu0 0
    %634 = vmatpush2.bf16.msra.mxu0 0
    %635 = vmatprep.subr.bf16.mxu0 0
    %636 = vmatpush2.bf16.msra.mxu0 0
    %637 = vmatprep.mubr.bf16.mxu0 0
    %638 = vmatmul.mubr.bf16.gmra.mxu0 %v533
    %v639 = vpop.f32.mrf.mxu0
    %v640 = vadd.f32 %v555, %v639
    %v641 = vpop.f32.mrf.mxu0
    %v642 = vpop.f32.mrf.mxu0
    %v643 = vadd.f32 %v555, %v642
    %v644 = vpop.f32.mrf.mxu0
    %645 = vdwg.mxu0
    %v646 = vpack.c.bf16 %v643, %v640
    %v647 = vld [vmem:[#allocation7] sm:$0xf]
    %v648 = vld [vmem:[#allocation7 + $0x4] sm:$0xf]
    %v649 = vld [vmem:[#allocation7 + $0x8] sm:$0xf]
    %v650 = vld [vmem:[#allocation7 + $0xc] sm:$0xf]
    %v651 = vld [vmem:[#allocation7 + $0x10] sm:$0xf]
    %v652 = vld [vmem:[#allocation7 + $0x14] sm:$0xf]
    %v653 = vld [vmem:[#allocation7 + $0x18] sm:$0xf]
    %v654 = vld [vmem:[#allocation7 + $0x1c] sm:$0xf]
    %v655 = vld [vmem:[#allocation7 + $0x20] sm:$0xf]
    %v656 = vld [vmem:[#allocation7 + $0x24] sm:$0xf]
    %v657 = vld [vmem:[#allocation7 + $0x28] sm:$0xf]
    %v658 = vld [vmem:[#allocation7 + $0x2c] sm:$0xf]
    %v659 = vld [vmem:[#allocation7 + $0x30] sm:$0xf]
    %v660 = vld [vmem:[#allocation7 + $0x34] sm:$0xf]
    %v661 = vld [vmem:[#allocation7 + $0x38] sm:$0xf]
    %v662 = vld [vmem:[#allocation7 + $0x3c] sm:$0xf]
    %v663 = vld [vmem:[%s23] sm:$0x1]
    %v665 = vlaneseq
    %v666 = vshrl.u32 %v665, 7
    %v667 = vsub.s32 0, %v666
    %v668 = vrot.slane %v663, %v667
    %v686 = vunpack.c.l.b16 %v647
    %v687 = vunpack.c.l.b16 %v648
    %v688 = vunpack.c.l.b16 %v649
    %v689 = vunpack.c.l.b16 %v650
    %v690 = vunpack.c.l.b16 %v651
    %v691 = vunpack.c.l.b16 %v652
    %v692 = vunpack.c.l.b16 %v653
    %v693 = vunpack.c.l.b16 %v654
    %v694 = vunpack.c.l.b16 %v655
    %v695 = vunpack.c.l.b16 %v656
    %v696 = vunpack.c.l.b16 %v657
    %v697 = vunpack.c.l.b16 %v658
    %v698 = vunpack.c.l.b16 %v659
    %v699 = vunpack.c.l.b16 %v660
    %v700 = vunpack.c.l.b16 %v661
    %v701 = vunpack.c.l.b16 %v662
    %v702 = vpack.c.b16 %v687, %v686
    %v703 = vpack.c.b16 %v689, %v688
    %v704 = vpack.c.b16 %v691, %v690
    %v705 = vpack.c.b16 %v693, %v692
    %v706 = vpack.c.b16 %v695, %v694
    %v707 = vpack.c.b16 %v697, %v696
    %v708 = vpack.c.b16 %v699, %v698
    %v709 = vpack.c.b16 %v701, %v700
    %718 = vmatprep.subr.bf16.mxu0 0
    %719 = vmatpush1.bf16.msra.mxu0 %v709
    %720 = vmatprep.subr.bf16.mxu0 0
    %721 = vmatpush1.bf16.msra.mxu0 %v708
    %722 = vmatprep.subr.bf16.mxu0 0
    %723 = vmatpush1.bf16.msra.mxu0 %v707
    %724 = vmatprep.subr.bf16.mxu0 0
    %725 = vmatpush1.bf16.msra.mxu0 %v706
    %726 = vmatprep.subr.bf16.mxu0 0
    %727 = vmatpush1.bf16.msra.mxu0 %v705
    %728 = vmatprep.subr.bf16.mxu0 0
    %729 = vmatpush1.bf16.msra.mxu0 %v704
    %730 = vmatprep.subr.bf16.mxu0 0
    %731 = vmatpush1.bf16.msra.mxu0 %v703
    %732 = vmatprep.subr.bf16.mxu0 0
    %733 = vmatpush1.bf16.msra.mxu0 %v702
    %734 = vmatprep.subr.bf16.mxu0 0
    %735 = vmatpush2.bf16.msra.mxu0 0
    %736 = vmatprep.subr.bf16.mxu0 0
    %737 = vmatpush2.bf16.msra.mxu0 0
    %738 = vmatprep.subr.bf16.mxu0 0
    %739 = vmatpush2.bf16.msra.mxu0 0
    %740 = vmatprep.subr.bf16.mxu0 0
    %741 = vmatpush2.bf16.msra.mxu0 0
    %742 = vmatprep.subr.bf16.mxu0 0
    %743 = vmatpush2.bf16.msra.mxu0 0
    %744 = vmatprep.subr.bf16.mxu0 0
    %745 = vmatpush2.bf16.msra.mxu0 0
    %746 = vmatprep.subr.bf16.mxu0 0
    %747 = vmatpush2.bf16.msra.mxu0 0
    %748 = vmatprep.subr.bf16.mxu0 0
    %749 = vmatpush2.bf16.msra.mxu0 0
    %750 = vmatprep.mubr.bf16.mxu0 0
    %751 = vmatmul.mubr.bf16.gmra.mxu0 %v646
    %v752 = vpop.f32.mrf.mxu0
    %v753 = vadd.f32 %v668, %v752
    %v754 = vpop.f32.mrf.mxu0
    %v755 = vpop.f32.mrf.mxu0
    %v756 = vadd.f32 %v668, %v755
    %v757 = vpop.f32.mrf.mxu0
    %758 = vdwg.mxu0
    %v759 = vmul.f32 %v753, %v753
    %v760 = vmul.f32 %v756, %v756
    %v761 = vmul.f32 %v753, %v759
    %v762 = vmul.f32 %v756, %v760
    %v763 = vmul.f32 %v761, 0.044715
    %v764 = vmul.f32 %v762, 0.044715
    %v765 = vadd.f32 %v753, %v763
    %v766 = vadd.f32 %v756, %v764
    %v767 = vmul.f32 %v765, 0.7978846
    %v768 = vmul.f32 %v766, 0.7978846
    %v769 = vtanh.pop %v767
    %v770 = vtanh.pop %v768
    %v771 = vadd.f32 %v769, 1.0
    %v772 = vadd.f32 %v770, 1.0
    %v773 = vmul.f32 %v771, 0.5
    %v774 = vmul.f32 %v772, 0.5
    %v775 = vmul.f32 %v753, %v773
    %v776 = vmul.f32 %v756, %v774
    %v777 = vpack.c.bf16 %v776, %v775
    %v778 = vld [vmem:[#allocation9] sm:$0xf]
    %v779 = vld [vmem:[#allocation9 + $0x4] sm:$0xf]
    %v780 = vld [vmem:[#allocation9 + $0x8] sm:$0xf]
    %v781 = vld [vmem:[#allocation9 + $0xc] sm:$0xf]
    %v782 = vld [vmem:[#allocation9 + $0x10] sm:$0xf]
    %v783 = vld [vmem:[#allocation9 + $0x14] sm:$0xf]
    %v784 = vld [vmem:[#allocation9 + $0x18] sm:$0xf]
    %v785 = vld [vmem:[#allocation9 + $0x1c] sm:$0xf]
    %v786 = vld [vmem:[#allocation9 + $0x20] sm:$0xf]
    %v787 = vld [vmem:[#allocation9 + $0x24] sm:$0xf]
    %v788 = vld [vmem:[#allocation9 + $0x28] sm:$0xf]
    %v789 = vld [vmem:[#allocation9 + $0x2c] sm:$0xf]
    %v790 = vld [vmem:[#allocation9 + $0x30] sm:$0xf]
    %v791 = vld [vmem:[#allocation9 + $0x34] sm:$0xf]
    %v792 = vld [vmem:[#allocation9 + $0x38] sm:$0xf]
    %v793 = vld [vmem:[#allocation9 + $0x3c] sm:$0xf]
    %v794 = vld [vmem:[%s27] sm:$0x1]
    %v796 = vlaneseq
    %v797 = vshrl.u32 %v796, 7
    %v798 = vsub.s32 0, %v797
    %v799 = vrot.slane %v794, %v798
    %v817 = vunpack.c.l.b16 %v778
    %v818 = vunpack.c.l.b16 %v779
    %v819 = vunpack.c.l.b16 %v780
    %v820 = vunpack.c.l.b16 %v781
    %v821 = vunpack.c.l.b16 %v782
    %v822 = vunpack.c.l.b16 %v783
    %v823 = vunpack.c.l.b16 %v784
    %v824 = vunpack.c.l.b16 %v785
    %v825 = vunpack.c.l.b16 %v786
    %v826 = vunpack.c.l.b16 %v787
    %v827 = vunpack.c.l.b16 %v788
    %v828 = vunpack.c.l.b16 %v789
    %v829 = vunpack.c.l.b16 %v790
    %v830 = vunpack.c.l.b16 %v791
    %v831 = vunpack.c.l.b16 %v792
    %v832 = vunpack.c.l.b16 %v793
    %v833 = vpack.c.b16 %v818, %v817
    %v834 = vpack.c.b16 %v820, %v819
    %v835 = vpack.c.b16 %v822, %v821
    %v836 = vpack.c.b16 %v824, %v823
    %v837 = vpack.c.b16 %v826, %v825
    %v838 = vpack.c.b16 %v828, %v827
    %v839 = vpack.c.b16 %v830, %v829
    %v840 = vpack.c.b16 %v832, %v831
    %849 = vmatprep.subr.bf16.mxu0 0
    %850 = vmatpush1.bf16.msra.mxu0 %v840
    %851 = vmatprep.subr.bf16.mxu0 0
    %852 = vmatpush1.bf16.msra.mxu0 %v839
    %853 = vmatprep.subr.bf16.mxu0 0
    %854 = vmatpush1.bf16.msra.mxu0 %v838
    %855 = vmatprep.subr.bf16.mxu0 0
    %856 = vmatpush1.bf16.msra.mxu0 %v837
    %857 = vmatprep.subr.bf16.mxu0 0
    %858 = vmatpush1.bf16.msra.mxu0 %v836
    %859 = vmatprep.subr.bf16.mxu0 0
    %860 = vmatpush1.bf16.msra.mxu0 %v835
    %861 = vmatprep.subr.bf16.mxu0 0
    %862 = vmatpush1.bf16.msra.mxu0 %v834
    %863 = vmatprep.subr.bf16.mxu0 0
    %864 = vmatpush1.bf16.msra.mxu0 %v833
    %865 = vmatprep.subr.bf16.mxu0 0
    %866 = vmatpush2.bf16.msra.mxu0 0
    %867 = vmatprep.subr.bf16.mxu0 0
    %868 = vmatpush2.bf16.msra.mxu0 0
    %869 = vmatprep.subr.bf16.mxu0 0
    %870 = vmatpush2.bf16.msra.mxu0 0
    %871 = vmatprep.subr.bf16.mxu0 0
    %872 = vmatpush2.bf16.msra.mxu0 0
    %873 = vmatprep.subr.bf16.mxu0 0
    %874 = vmatpush2.bf16.msra.mxu0 0
    %875 = vmatprep.subr.bf16.mxu0 0
    %876 = vmatpush2.bf16.msra.mxu0 0
    %877 = vmatprep.subr.bf16.mxu0 0
    %878 = vmatpush2.bf16.msra.mxu0 0
    %879 = vmatprep.subr.bf16.mxu0 0
    %880 = vmatpush2.bf16.msra.mxu0 0
    %881 = vmatprep.mubr.bf16.mxu0 0
    %882 = vmatmul.mubr.bf16.gmra.mxu0 %v777
    %v883 = vpop.f32.mrf.mxu0
    %v884 = vadd.f32 %v799, %v883
    %v885 = vpop.f32.mrf.mxu0
    %v886 = vpop.f32.mrf.mxu0
    %v887 = vadd.f32 %v799, %v886
    %v888 = vpop.f32.mrf.mxu0
    %889 = vdwg.mxu0
    %v890 = vtanh.pop %v884
    %v891 = vtanh.pop %v887
    %v892 = vpack.c.bf16 %v891, %v890
    %v893 = vld [vmem:[#allocation10] sm:$0xf]
    %v894 = vld [vmem:[#allocation10 + $0x4] sm:$0xf]
    %v895 = vld [vmem:[#allocation10 + $0x8] sm:$0xf]
    %v896 = vld [vmem:[#allocation10 + $0xc] sm:$0xf]
    %v897 = vld [vmem:[#allocation10 + $0x10] sm:$0xf]
    %v898 = vld [vmem:[#allocation10 + $0x14] sm:$0xf]
    %v899 = vld [vmem:[#allocation10 + $0x18] sm:$0xf]
    %v900 = vld [vmem:[#allocation10 + $0x1c] sm:$0xf]
    %v901 = vld [vmem:[#allocation10 + $0x20] sm:$0xf]
    %v902 = vld [vmem:[#allocation10 + $0x24] sm:$0xf]
    %v903 = vld [vmem:[#allocation10 + $0x28] sm:$0xf]
    %v904 = vld [vmem:[#allocation10 + $0x2c] sm:$0xf]
    %v905 = vld [vmem:[#allocation10 + $0x30] sm:$0xf]
    %v906 = vld [vmem:[#allocation10 + $0x34] sm:$0xf]
    %v907 = vld [vmem:[#allocation10 + $0x38] sm:$0xf]
    %v908 = vld [vmem:[#allocation10 + $0x3c] sm:$0xf]
    %v909 = vld [vmem:[%s31] sm:$0x1]
    %v911 = vlaneseq
    %v912 = vshrl.u32 %v911, 7
    %v913 = vsub.s32 0, %v912
    %v914 = vrot.slane %v909, %v913
    %v932 = vunpack.c.l.b16 %v893
    %v933 = vunpack.c.l.b16 %v894
    %v934 = vunpack.c.l.b16 %v895
    %v935 = vunpack.c.l.b16 %v896
    %v936 = vunpack.c.l.b16 %v897
    %v937 = vunpack.c.l.b16 %v898
    %v938 = vunpack.c.l.b16 %v899
    %v939 = vunpack.c.l.b16 %v900
    %v940 = vunpack.c.l.b16 %v901
    %v941 = vunpack.c.l.b16 %v902
    %v942 = vunpack.c.l.b16 %v903
    %v943 = vunpack.c.l.b16 %v904
    %v944 = vunpack.c.l.b16 %v905
    %v945 = vunpack.c.l.b16 %v906
    %v946 = vunpack.c.l.b16 %v907
    %v947 = vunpack.c.l.b16 %v908
    %v948 = vpack.c.b16 %v933, %v932
    %v949 = vpack.c.b16 %v935, %v934
    %v950 = vpack.c.b16 %v937, %v936
    %v951 = vpack.c.b16 %v939, %v938
    %v952 = vpack.c.b16 %v941, %v940
    %v953 = vpack.c.b16 %v943, %v942
    %v954 = vpack.c.b16 %v945, %v944
    %v955 = vpack.c.b16 %v947, %v946
    %964 = vmatprep.subr.bf16.mxu0 0
    %965 = vmatpush1.bf16.msra.mxu0 %v955
    %966 = vmatprep.subr.bf16.mxu0 0
    %967 = vmatpush1.bf16.msra.mxu0 %v954
    %968 = vmatprep.subr.bf16.mxu0 0
    %969 = vmatpush1.bf16.msra.mxu0 %v953
    %970 = vmatprep.subr.bf16.mxu0 0
    %971 = vmatpush1.bf16.msra.mxu0 %v952
    %972 = vmatprep.subr.bf16.mxu0 0
    %973 = vmatpush1.bf16.msra.mxu0 %v951
    %974 = vmatprep.subr.bf16.mxu0 0
    %975 = vmatpush1.bf16.msra.mxu0 %v950
    %976 = vmatprep.subr.bf16.mxu0 0
    %977 = vmatpush1.bf16.msra.mxu0 %v949
    %978 = vmatprep.subr.bf16.mxu0 0
    %979 = vmatpush1.bf16.msra.mxu0 %v948
    %980 = vmatprep.subr.bf16.mxu0 0
    %981 = vmatpush2.bf16.msra.mxu0 0
    %982 = vmatprep.subr.bf16.mxu0 0
    %983 = vmatpush2.bf16.msra.mxu0 0
    %984 = vmatprep.subr.bf16.mxu0 0
    %985 = vmatpush2.bf16.msra.mxu0 0
    %986 = vmatprep.subr.bf16.mxu0 0
    %987 = vmatpush2.bf16.msra.mxu0 0
    %988 = vmatprep.subr.bf16.mxu0 0
    %989 = vmatpush2.bf16.msra.mxu0 0
    %990 = vmatprep.subr.bf16.mxu0 0
    %991 = vmatpush2.bf16.msra.mxu0 0
    %992 = vmatprep.subr.bf16.mxu0 0
    %993 = vmatpush2.bf16.msra.mxu0 0
    %994 = vmatprep.subr.bf16.mxu0 0
    %995 = vmatpush2.bf16.msra.mxu0 0
    %996 = vmatprep.mubr.bf16.mxu0 0
    %997 = vmatmul.mubr.bf16.gmra.mxu0 %v892
    %v998 = vpop.f32.mrf.mxu0
    %v999 = vadd.f32 %v914, %v998
    %v1000 = vpop.f32.mrf.mxu0
    %v1001 = vpop.f32.mrf.mxu0
    %v1002 = vadd.f32 %v914, %v1001
    %v1003 = vpop.f32.mrf.mxu0
    %1004 = vdwg.mxu0
    %v1005 = vmul.f32 %v999, %v999
    %v1006 = vmul.f32 %v1002, %v1002
    %v1007 = vmul.f32 %v999, %v1005
    %v1008 = vmul.f32 %v1002, %v1006
    %v1009 = vmul.f32 %v1007, 0.044715
    %v1010 = vmul.f32 %v1008, 0.044715
    %v1011 = vadd.f32 %v999, %v1009
    %v1012 = vadd.f32 %v1002, %v1010
    %v1013 = vmul.f32 %v1011, 0.7978846
    %v1014 = vmul.f32 %v1012, 0.7978846
    %v1015 = vtanh.pop %v1013
    %v1016 = vtanh.pop %v1014
    %v1017 = vadd.f32 %v1015, 1.0
    %v1018 = vadd.f32 %v1016, 1.0
    %v1019 = vmul.f32 %v1017, 0.5
    %v1020 = vmul.f32 %v1018, 0.5
    %v1021 = vmul.f32 %v999, %v1019
    %v1022 = vmul.f32 %v1002, %v1020
    %v1023 = vpack.c.bf16 %v1022, %v1021
    %v1024 = vld [vmem:[#allocation12] sm:$0xf]
    %v1025 = vld [vmem:[#allocation12 + $0x4] sm:$0xf]
    %v1026 = vld [vmem:[#allocation12 + $0x8] sm:$0xf]
    %v1027 = vld [vmem:[#allocation12 + $0xc] sm:$0xf]
    %v1028 = vld [vmem:[#allocation12 + $0x10] sm:$0xf]
    %v1029 = vld [vmem:[#allocation12 + $0x14] sm:$0xf]
    %v1030 = vld [vmem:[#allocation12 + $0x18] sm:$0xf]
    %v1031 = vld [vmem:[#allocation12 + $0x1c] sm:$0xf]
    %v1032 = vld [vmem:[#allocation12 + $0x20] sm:$0xf]
    %v1033 = vld [vmem:[#allocation12 + $0x24] sm:$0xf]
    %v1034 = vld [vmem:[#allocation12 + $0x28] sm:$0xf]
    %v1035 = vld [vmem:[#allocation12 + $0x2c] sm:$0xf]
    %v1036 = vld [vmem:[#allocation12 + $0x30] sm:$0xf]
    %v1037 = vld [vmem:[#allocation12 + $0x34] sm:$0xf]
    %v1038 = vld [vmem:[#allocation12 + $0x38] sm:$0xf]
    %v1039 = vld [vmem:[#allocation12 + $0x3c] sm:$0xf]
    %v1040 = vld [vmem:[%s35] sm:$0x1]
    %v1042 = vlaneseq
    %v1043 = vshrl.u32 %v1042, 7
    %v1044 = vsub.s32 0, %v1043
    %v1045 = vrot.slane %v1040, %v1044
    %v1063 = vunpack.c.l.b16 %v1024
    %v1064 = vunpack.c.l.b16 %v1025
    %v1065 = vunpack.c.l.b16 %v1026
    %v1066 = vunpack.c.l.b16 %v1027
    %v1067 = vunpack.c.l.b16 %v1028
    %v1068 = vunpack.c.l.b16 %v1029
    %v1069 = vunpack.c.l.b16 %v1030
    %v1070 = vunpack.c.l.b16 %v1031
    %v1071 = vunpack.c.l.b16 %v1032
    %v1072 = vunpack.c.l.b16 %v1033
    %v1073 = vunpack.c.l.b16 %v1034
    %v1074 = vunpack.c.l.b16 %v1035
    %v1075 = vunpack.c.l.b16 %v1036
    %v1076 = vunpack.c.l.b16 %v1037
    %v1077 = vunpack.c.l.b16 %v1038
    %v1078 = vunpack.c.l.b16 %v1039
    %v1079 = vpack.c.b16 %v1064, %v1063
    %v1080 = vpack.c.b16 %v1066, %v1065
    %v1081 = vpack.c.b16 %v1068, %v1067
    %v1082 = vpack.c.b16 %v1070, %v1069
    %v1083 = vpack.c.b16 %v1072, %v1071
    %v1084 = vpack.c.b16 %v1074, %v1073
    %v1085 = vpack.c.b16 %v1076, %v1075
    %v1086 = vpack.c.b16 %v1078, %v1077
    %1095 = vmatprep.subr.bf16.mxu0 0
    %1096 = vmatpush1.bf16.msra.mxu0 %v1086
    %1097 = vmatprep.subr.bf16.mxu0 0
    %1098 = vmatpush1.bf16.msra.mxu0 %v1085
    %1099 = vmatprep.subr.bf16.mxu0 0
    %1100 = vmatpush1.bf16.msra.mxu0 %v1084
    %1101 = vmatprep.subr.bf16.mxu0 0
    %1102 = vmatpush1.bf16.msra.mxu0 %v1083
    %1103 = vmatprep.subr.bf16.mxu0 0
    %1104 = vmatpush1.bf16.msra.mxu0 %v1082
    %1105 = vmatprep.subr.bf16.mxu0 0
    %1106 = vmatpush1.bf16.msra.mxu0 %v1081
    %1107 = vmatprep.subr.bf16.mxu0 0
    %1108 = vmatpush1.bf16.msra.mxu0 %v1080
    %1109 = vmatprep.subr.bf16.mxu0 0
    %1110 = vmatpush1.bf16.msra.mxu0 %v1079
    %1111 = vmatprep.subr.bf16.mxu0 0
    %1112 = vmatpush2.bf16.msra.mxu0 0
    %1113 = vmatprep.subr.bf16.mxu0 0
    %1114 = vmatpush2.bf16.msra.mxu0 0
    %1115 = vmatprep.subr.bf16.mxu0 0
    %1116 = vmatpush2.bf16.msra.mxu0 0
    %1117 = vmatprep.subr.bf16.mxu0 0
    %1118 = vmatpush2.bf16.msra.mxu0 0
    %1119 = vmatprep.subr.bf16.mxu0 0
    %1120 = vmatpush2.bf16.msra.mxu0 0
    %1121 = vmatprep.subr.bf16.mxu0 0
    %1122 = vmatpush2.bf16.msra.mxu0 0
    %1123 = vmatprep.subr.bf16.mxu0 0
    %1124 = vmatpush2.bf16.msra.mxu0 0
    %1125 = vmatprep.subr.bf16.mxu0 0
    %1126 = vmatpush2.bf16.msra.mxu0 0
    %1127 = vmatprep.mubr.bf16.mxu0 0
    %1128 = vmatmul.mubr.bf16.gmra.mxu0 %v1023
    %v1129 = vpop.f32.mrf.mxu0
    %v1130 = vadd.f32 %v1045, %v1129
    %v1131 = vpop.f32.mrf.mxu0
    %v1132 = vpop.f32.mrf.mxu0
    %v1133 = vadd.f32 %v1045, %v1132
    %v1134 = vpop.f32.mrf.mxu0
    %1135 = vdwg.mxu0
    %v1136 = vmul.f32 %v1130, %v1130
    %v1137 = vmul.f32 %v1133, %v1133
    %v1138 = vmul.f32 %v1130, %v1136
    %v1139 = vmul.f32 %v1133, %v1137
    %v1140 = vmul.f32 %v1138, 0.044715
    %v1141 = vmul.f32 %v1139, 0.044715
    %v1142 = vadd.f32 %v1130, %v1140
    %v1143 = vadd.f32 %v1133, %v1141
    %v1144 = vmul.f32 %v1142, 0.7978846
    %v1145 = vmul.f32 %v1143, 0.7978846
    %v1146 = vtanh.pop %v1144
    %v1147 = vtanh.pop %v1145
    %v1148 = vadd.f32 %v1146, 1.0
    %v1149 = vadd.f32 %v1147, 1.0
    %v1150 = vmul.f32 %v1148, 0.5
    %v1151 = vmul.f32 %v1149, 0.5
    %v1152 = vmul.f32 %v1130, %v1150
    %v1153 = vmul.f32 %v1133, %v1151
    %v1154 = vpack.c.bf16 %v1153, %v1152
    %v1155 = vld [vmem:[#allocation13] sm:$0xf]
    %v1156 = vld [vmem:[#allocation13 + $0x4] sm:$0xf]
    %v1157 = vld [vmem:[#allocation13 + $0x8] sm:$0xf]
    %v1158 = vld [vmem:[#allocation13 + $0xc] sm:$0xf]
    %v1159 = vld [vmem:[#allocation13 + $0x10] sm:$0xf]
    %v1160 = vld [vmem:[#allocation13 + $0x14] sm:$0xf]
    %v1161 = vld [vmem:[#allocation13 + $0x18] sm:$0xf]
    %v1162 = vld [vmem:[#allocation13 + $0x1c] sm:$0xf]
    %v1163 = vld [vmem:[#allocation13 + $0x20] sm:$0xf]
    %v1164 = vld [vmem:[#allocation13 + $0x24] sm:$0xf]
    %v1165 = vld [vmem:[#allocation13 + $0x28] sm:$0xf]
    %v1166 = vld [vmem:[#allocation13 + $0x2c] sm:$0xf]
    %v1167 = vld [vmem:[#allocation13 + $0x30] sm:$0xf]
    %v1168 = vld [vmem:[#allocation13 + $0x34] sm:$0xf]
    %v1169 = vld [vmem:[#allocation13 + $0x38] sm:$0xf]
    %v1170 = vld [vmem:[#allocation13 + $0x3c] sm:$0xf]
    %v1171 = vld [vmem:[%s39] sm:$0x1]
    %v1173 = vlaneseq
    %v1174 = vshrl.u32 %v1173, 7
    %v1175 = vsub.s32 0, %v1174
    %v1176 = vrot.slane %v1171, %v1175
    %v1194 = vunpack.c.l.b16 %v1155
    %v1195 = vunpack.c.l.b16 %v1156
    %v1196 = vunpack.c.l.b16 %v1157
    %v1197 = vunpack.c.l.b16 %v1158
    %v1198 = vunpack.c.l.b16 %v1159
    %v1199 = vunpack.c.l.b16 %v1160
    %v1200 = vunpack.c.l.b16 %v1161
    %v1201 = vunpack.c.l.b16 %v1162
    %v1202 = vunpack.c.l.b16 %v1163
    %v1203 = vunpack.c.l.b16 %v1164
    %v1204 = vunpack.c.l.b16 %v1165
    %v1205 = vunpack.c.l.b16 %v1166
    %v1206 = vunpack.c.l.b16 %v1167
    %v1207 = vunpack.c.l.b16 %v1168
    %v1208 = vunpack.c.l.b16 %v1169
    %v1209 = vunpack.c.l.b16 %v1170
    %v1210 = vpack.c.b16 %v1195, %v1194
    %v1211 = vpack.c.b16 %v1197, %v1196
    %v1212 = vpack.c.b16 %v1199, %v1198
    %v1213 = vpack.c.b16 %v1201, %v1200
    %v1214 = vpack.c.b16 %v1203, %v1202
    %v1215 = vpack.c.b16 %v1205, %v1204
    %v1216 = vpack.c.b16 %v1207, %v1206
    %v1217 = vpack.c.b16 %v1209, %v1208
    %1226 = vmatprep.subr.bf16.mxu0 0
    %1227 = vmatpush1.bf16.msra.mxu0 %v1217
    %1228 = vmatprep.subr.bf16.mxu0 0
    %1229 = vmatpush1.bf16.msra.mxu0 %v1216
    %1230 = vmatprep.subr.bf16.mxu0 0
    %1231 = vmatpush1.bf16.msra.mxu0 %v1215
    %1232 = vmatprep.subr.bf16.mxu0 0
    %1233 = vmatpush1.bf16.msra.mxu0 %v1214
    %1234 = vmatprep.subr.bf16.mxu0 0
    %1235 = vmatpush1.bf16.msra.mxu0 %v1213
    %1236 = vmatprep.subr.bf16.mxu0 0
    %1237 = vmatpush1.bf16.msra.mxu0 %v1212
    %1238 = vmatprep.subr.bf16.mxu0 0
    %1239 = vmatpush1.bf16.msra.mxu0 %v1211
    %1240 = vmatprep.subr.bf16.mxu0 0
    %1241 = vmatpush1.bf16.msra.mxu0 %v1210
    %1242 = vmatprep.subr.bf16.mxu0 0
    %1243 = vmatpush2.bf16.msra.mxu0 0
    %1244 = vmatprep.subr.bf16.mxu0 0
    %1245 = vmatpush2.bf16.msra.mxu0 0
    %1246 = vmatprep.subr.bf16.mxu0 0
    %1247 = vmatpush2.bf16.msra.mxu0 0
    %1248 = vmatprep.subr.bf16.mxu0 0
    %1249 = vmatpush2.bf16.msra.mxu0 0
    %1250 = vmatprep.subr.bf16.mxu0 0
    %1251 = vmatpush2.bf16.msra.mxu0 0
    %1252 = vmatprep.subr.bf16.mxu0 0
    %1253 = vmatpush2.bf16.msra.mxu0 0
    %1254 = vmatprep.subr.bf16.mxu0 0
    %1255 = vmatpush2.bf16.msra.mxu0 0
    %1256 = vmatprep.subr.bf16.mxu0 0
    %1257 = vmatpush2.bf16.msra.mxu0 0
    %1258 = vmatprep.mubr.bf16.mxu0 0
    %1259 = vmatmul.mubr.bf16.gmra.mxu0 %v1154
    %v1260 = vpop.f32.mrf.mxu0
    %v1261 = vadd.f32 %v1176, %v1260
    %v1262 = vpop.f32.mrf.mxu0
    %v1263 = vpop.f32.mrf.mxu0
    %v1264 = vadd.f32 %v1176, %v1263
    %v1265 = vpop.f32.mrf.mxu0
    %1266 = vdwg.mxu0
    %v1267 = vtanh.pop %v1261
    %v1268 = vtanh.pop %v1264
    %v1269 = vpack.c.bf16 %v1268, %v1267
    %v1270 = vld [vmem:[#allocation15] sm:$0xf]
    %v1271 = vld [vmem:[#allocation15 + $0x4] sm:$0xf]
    %v1272 = vld [vmem:[#allocation15 + $0x8] sm:$0xf]
    %v1273 = vld [vmem:[#allocation15 + $0xc] sm:$0xf]
    %v1274 = vld [vmem:[#allocation15 + $0x10] sm:$0xf]
    %v1275 = vld [vmem:[#allocation15 + $0x14] sm:$0xf]
    %v1276 = vld [vmem:[#allocation15 + $0x18] sm:$0xf]
    %v1277 = vld [vmem:[#allocation15 + $0x1c] sm:$0xf]
    %v1278 = vld [vmem:[#allocation15 + $0x20] sm:$0xf]
    %v1279 = vld [vmem:[#allocation15 + $0x24] sm:$0xf]
    %v1280 = vld [vmem:[#allocation15 + $0x28] sm:$0xf]
    %v1281 = vld [vmem:[#allocation15 + $0x2c] sm:$0xf]
    %v1282 = vld [vmem:[#allocation15 + $0x30] sm:$0xf]
    %v1283 = vld [vmem:[#allocation15 + $0x34] sm:$0xf]
    %v1284 = vld [vmem:[#allocation15 + $0x38] sm:$0xf]
    %v1285 = vld [vmem:[#allocation15 + $0x3c] sm:$0xf]
    %v1286 = vld [vmem:[%s43] sm:$0x1]
    %v1288 = vlaneseq
    %v1289 = vshrl.u32 %v1288, 7
    %v1290 = vsub.s32 0, %v1289
    %v1291 = vrot.slane %v1286, %v1290
    %v1309 = vunpack.c.l.b16 %v1270
    %v1310 = vunpack.c.l.b16 %v1271
    %v1311 = vunpack.c.l.b16 %v1272
    %v1312 = vunpack.c.l.b16 %v1273
    %v1313 = vunpack.c.l.b16 %v1274
    %v1314 = vunpack.c.l.b16 %v1275
    %v1315 = vunpack.c.l.b16 %v1276
    %v1316 = vunpack.c.l.b16 %v1277
    %v1317 = vunpack.c.l.b16 %v1278
    %v1318 = vunpack.c.l.b16 %v1279
    %v1319 = vunpack.c.l.b16 %v1280
    %v1320 = vunpack.c.l.b16 %v1281
    %v1321 = vunpack.c.l.b16 %v1282
    %v1322 = vunpack.c.l.b16 %v1283
    %v1323 = vunpack.c.l.b16 %v1284
    %v1324 = vunpack.c.l.b16 %v1285
    %v1325 = vpack.c.b16 %v1310, %v1309
    %v1326 = vpack.c.b16 %v1312, %v1311
    %v1327 = vpack.c.b16 %v1314, %v1313
    %v1328 = vpack.c.b16 %v1316, %v1315
    %v1329 = vpack.c.b16 %v1318, %v1317
    %v1330 = vpack.c.b16 %v1320, %v1319
    %v1331 = vpack.c.b16 %v1322, %v1321
    %v1332 = vpack.c.b16 %v1324, %v1323
    %1341 = vmatprep.subr.bf16.mxu0 0
    %1342 = vmatpush1.bf16.msra.mxu0 %v1332
    %1343 = vmatprep.subr.bf16.mxu0 0
    %1344 = vmatpush1.bf16.msra.mxu0 %v1331
    %1345 = vmatprep.subr.bf16.mxu0 0
    %1346 = vmatpush1.bf16.msra.mxu0 %v1330
    %1347 = vmatprep.subr.bf16.mxu0 0
    %1348 = vmatpush1.bf16.msra.mxu0 %v1329
    %1349 = vmatprep.subr.bf16.mxu0 0
    %1350 = vmatpush1.bf16.msra.mxu0 %v1328
    %1351 = vmatprep.subr.bf16.mxu0 0
    %1352 = vmatpush1.bf16.msra.mxu0 %v1327
    %1353 = vmatprep.subr.bf16.mxu0 0
    %1354 = vmatpush1.bf16.msra.mxu0 %v1326
    %1355 = vmatprep.subr.bf16.mxu0 0
    %1356 = vmatpush1.bf16.msra.mxu0 %v1325
    %1357 = vmatprep.subr.bf16.mxu0 0
    %1358 = vmatpush2.bf16.msra.mxu0 0
    %1359 = vmatprep.subr.bf16.mxu0 0
    %1360 = vmatpush2.bf16.msra.mxu0 0
    %1361 = vmatprep.subr.bf16.mxu0 0
    %1362 = vmatpush2.bf16.msra.mxu0 0
    %1363 = vmatprep.subr.bf16.mxu0 0
    %1364 = vmatpush2.bf16.msra.mxu0 0
    %1365 = vmatprep.subr.bf16.mxu0 0
    %1366 = vmatpush2.bf16.msra.mxu0 0
    %1367 = vmatprep.subr.bf16.mxu0 0
    %1368 = vmatpush2.bf16.msra.mxu0 0
    %1369 = vmatprep.subr.bf16.mxu0 0
    %1370 = vmatpush2.bf16.msra.mxu0 0
    %1371 = vmatprep.subr.bf16.mxu0 0
    %1372 = vmatpush2.bf16.msra.mxu0 0
    %1373 = vmatprep.mubr.bf16.mxu0 0
    %1374 = vmatmul.mubr.bf16.gmra.mxu0 %v1269
    %v1375 = vpop.f32.mrf.mxu0
    %v1376 = vadd.f32 %v1291, %v1375
    %v1377 = vpop.f32.mrf.mxu0
    %v1378 = vpop.f32.mrf.mxu0
    %v1379 = vadd.f32 %v1291, %v1378
    %v1380 = vpop.f32.mrf.mxu0
    %1381 = vdwg.mxu0
    %v1382 = vadd.f32 %v1267, %v1376
    %v1383 = vadd.f32 %v1268, %v1379
    %v1384 = vpack.c.bf16 %v1383, %v1382
    %v1385 = vld [vmem:[%s45] sm:$0xff]
    %v1386 = vld [vmem:[%s45 + $0x8] sm:$0xff]
    %v1387 = vld [vmem:[%s45 + $0x10] sm:$0xff]
    %v1388 = vld [vmem:[%s45 + $0x18] sm:$0xff]
    %v1389 = vld [vmem:[%s45 + $0x20] sm:$0xff]
    %v1390 = vld [vmem:[%s45 + $0x28] sm:$0xff]
    %v1391 = vld [vmem:[%s45 + $0x30] sm:$0xff]
    %v1392 = vld [vmem:[%s45 + $0x38] sm:$0xff]
    %v1393 = vld [vmem:[%s45 + $0x40] sm:$0xff]
    %v1394 = vld [vmem:[%s45 + $0x48] sm:$0xff]
    %v1395 = vld [vmem:[%s45 + $0x50] sm:$0xff]
    %v1396 = vld [vmem:[%s45 + $0x58] sm:$0xff]
    %v1397 = vld [vmem:[%s45 + $0x60] sm:$0xff]
    %v1398 = vld [vmem:[%s45 + $0x68] sm:$0xff]
    %v1399 = vld [vmem:[%s45 + $0x70] sm:$0xff]
    %v1400 = vld [vmem:[%s45 + $0x78] sm:$0xff]
    %v1401 = vld [vmem:[%s47] sm:$0x3]
    %v1403 = vlaneseq
    %v1404 = vshrl.u32 %v1403, 7
    %v1405 = vsub.s32 0, %v1404
    %v1406 = vrot.slane %v1401, %v1405
    %v1407 = vlaneseq
    %v1408 = vshrl.u32 %v1407, 7
    %v1409 = vsub.s32 1, %v1408
    %v1410 = vrot.slane %v1401, %v1409
    %v1429 = vunpack.c.l.b16 %v1385
    %v1430 = vunpack.c.h.b16 %v1385
    %v1431 = vunpack.c.l.b16 %v1386
    %v1432 = vunpack.c.h.b16 %v1386
    %v1433 = vunpack.c.l.b16 %v1387
    %v1434 = vunpack.c.h.b16 %v1387
    %v1435 = vunpack.c.l.b16 %v1388
    %v1436 = vunpack.c.h.b16 %v1388
    %v1437 = vunpack.c.l.b16 %v1389
    %v1438 = vunpack.c.h.b16 %v1389
    %v1439 = vunpack.c.l.b16 %v1390
    %v1440 = vunpack.c.h.b16 %v1390
    %v1441 = vunpack.c.l.b16 %v1391
    %v1442 = vunpack.c.h.b16 %v1391
    %v1443 = vunpack.c.l.b16 %v1392
    %v1444 = vunpack.c.h.b16 %v1392
    %v1445 = vunpack.c.l.b16 %v1393
    %v1446 = vunpack.c.h.b16 %v1393
    %v1447 = vunpack.c.l.b16 %v1394
    %v1448 = vunpack.c.h.b16 %v1394
    %v1449 = vunpack.c.l.b16 %v1395
    %v1450 = vunpack.c.h.b16 %v1395
    %v1451 = vunpack.c.l.b16 %v1396
    %v1452 = vunpack.c.h.b16 %v1396
    %v1453 = vunpack.c.l.b16 %v1397
    %v1454 = vunpack.c.h.b16 %v1397
    %v1455 = vunpack.c.l.b16 %v1398
    %v1456 = vunpack.c.h.b16 %v1398
    %v1457 = vunpack.c.l.b16 %v1399
    %v1458 = vunpack.c.h.b16 %v1399
    %v1459 = vunpack.c.l.b16 %v1400
    %v1460 = vunpack.c.h.b16 %v1400
    %v1461 = vpack.c.b16 %v1431, %v1429
    %v1462 = vpack.c.b16 %v1432, %v1430
    %v1463 = vpack.c.b16 %v1435, %v1433
    %v1464 = vpack.c.b16 %v1436, %v1434
    %v1465 = vpack.c.b16 %v1439, %v1437
    %v1466 = vpack.c.b16 %v1440, %v1438
    %v1467 = vpack.c.b16 %v1443, %v1441
    %v1468 = vpack.c.b16 %v1444, %v1442
    %v1469 = vpack.c.b16 %v1447, %v1445
    %v1470 = vpack.c.b16 %v1448, %v1446
    %v1471 = vpack.c.b16 %v1451, %v1449
    %v1472 = vpack.c.b16 %v1452, %v1450
    %v1473 = vpack.c.b16 %v1455, %v1453
    %v1474 = vpack.c.b16 %v1456, %v1454
    %v1475 = vpack.c.b16 %v1459, %v1457
    %v1476 = vpack.c.b16 %v1460, %v1458
    %1493 = vmatprep.subr.bf16.mxu0 %v1476
    %1494 = vmatpush1.bf16.msra.mxu0 %v1475
    %1495 = vmatprep.subr.bf16.mxu0 %v1474
    %1496 = vmatpush1.bf16.msra.mxu0 %v1473
    %1497 = vmatprep.subr.bf16.mxu0 %v1472
    %1498 = vmatpush1.bf16.msra.mxu0 %v1471
    %1499 = vmatprep.subr.bf16.mxu0 %v1470
    %1500 = vmatpush1.bf16.msra.mxu0 %v1469
    %1501 = vmatprep.subr.bf16.mxu0 %v1468
    %1502 = vmatpush1.bf16.msra.mxu0 %v1467
    %1503 = vmatprep.subr.bf16.mxu0 %v1466
    %1504 = vmatpush1.bf16.msra.mxu0 %v1465
    %1505 = vmatprep.subr.bf16.mxu0 %v1464
    %1506 = vmatpush1.bf16.msra.mxu0 %v1463
    %1507 = vmatprep.subr.bf16.mxu0 %v1462
    %1508 = vmatpush1.bf16.msra.mxu0 %v1461
    %1509 = vmatprep.subr.bf16.mxu0 0
    %1510 = vmatpush2.bf16.msra.mxu0 0
    %1511 = vmatprep.subr.bf16.mxu0 0
    %1512 = vmatpush2.bf16.msra.mxu0 0
    %1513 = vmatprep.subr.bf16.mxu0 0
    %1514 = vmatpush2.bf16.msra.mxu0 0
    %1515 = vmatprep.subr.bf16.mxu0 0
    %1516 = vmatpush2.bf16.msra.mxu0 0
    %1517 = vmatprep.subr.bf16.mxu0 0
    %1518 = vmatpush2.bf16.msra.mxu0 0
    %1519 = vmatprep.subr.bf16.mxu0 0
    %1520 = vmatpush2.bf16.msra.mxu0 0
    %1521 = vmatprep.subr.bf16.mxu0 0
    %1522 = vmatpush2.bf16.msra.mxu0 0
    %1523 = vmatprep.subr.bf16.mxu0 0
    %1524 = vmatpush2.bf16.msra.mxu0 0
    %1525 = vmatprep.mubr.bf16.mxu0 0
    %1526 = vmatmul.mubr.bf16.gmra.mxu0 %v1384
    %v1527 = vpop.f32.mrf.mxu0
    %v1528 = vadd.f32 %v1406, %v1527
    %v1529 = vpop.f32.mrf.mxu0
    %v1530 = vadd.f32 %v1410, %v1529
    %v1531 = vpop.f32.mrf.mxu0
    %v1532 = vadd.f32 %v1406, %v1531
    %v1533 = vpop.f32.mrf.mxu0
    %v1534 = vadd.f32 %v1410, %v1533
    %1535 = vdwg.mxu0
    %v1536 = vpack.c.bf16 %v1532, %v1528
    %v1537 = vld [vmem:[#allocation16] sm:$0xf]
    %v1538 = vld [vmem:[#allocation16 + $0x4] sm:$0xf]
    %v1539 = vld [vmem:[#allocation16 + $0x8] sm:$0xf]
    %v1540 = vld [vmem:[#allocation16 + $0xc] sm:$0xf]
    %v1541 = vld [vmem:[#allocation16 + $0x10] sm:$0xf]
    %v1542 = vld [vmem:[#allocation16 + $0x14] sm:$0xf]
    %v1543 = vld [vmem:[#allocation16 + $0x18] sm:$0xf]
    %v1544 = vld [vmem:[#allocation16 + $0x1c] sm:$0xf]
    %v1545 = vld [vmem:[#allocation16 + $0x20] sm:$0xf]
    %v1546 = vld [vmem:[#allocation16 + $0x24] sm:$0xf]
    %v1547 = vld [vmem:[#allocation16 + $0x28] sm:$0xf]
    %v1548 = vld [vmem:[#allocation16 + $0x2c] sm:$0xf]
    %v1549 = vld [vmem:[#allocation16 + $0x30] sm:$0xf]
    %v1550 = vld [vmem:[#allocation16 + $0x34] sm:$0xf]
    %v1551 = vld [vmem:[#allocation16 + $0x38] sm:$0xf]
    %v1552 = vld [vmem:[#allocation16 + $0x3c] sm:$0xf]
    %v1553 = vld [vmem:[%s51] sm:$0x1]
    %v1555 = vlaneseq
    %v1556 = vshrl.u32 %v1555, 7
    %v1557 = vsub.s32 0, %v1556
    %v1558 = vrot.slane %v1553, %v1557
    %v1576 = vunpack.c.l.b16 %v1537
    %v1577 = vunpack.c.l.b16 %v1538
    %v1578 = vunpack.c.l.b16 %v1539
    %v1579 = vunpack.c.l.b16 %v1540
    %v1580 = vunpack.c.l.b16 %v1541
    %v1581 = vunpack.c.l.b16 %v1542
    %v1582 = vunpack.c.l.b16 %v1543
    %v1583 = vunpack.c.l.b16 %v1544
    %v1584 = vunpack.c.l.b16 %v1545
    %v1585 = vunpack.c.l.b16 %v1546
    %v1586 = vunpack.c.l.b16 %v1547
    %v1587 = vunpack.c.l.b16 %v1548
    %v1588 = vunpack.c.l.b16 %v1549
    %v1589 = vunpack.c.l.b16 %v1550
    %v1590 = vunpack.c.l.b16 %v1551
    %v1591 = vunpack.c.l.b16 %v1552
    %v1592 = vpack.c.b16 %v1577, %v1576
    %v1593 = vpack.c.b16 %v1579, %v1578
    %v1594 = vpack.c.b16 %v1581, %v1580
    %v1595 = vpack.c.b16 %v1583, %v1582
    %v1596 = vpack.c.b16 %v1585, %v1584
    %v1597 = vpack.c.b16 %v1587, %v1586
    %v1598 = vpack.c.b16 %v1589, %v1588
    %v1599 = vpack.c.b16 %v1591, %v1590
    %1608 = vmatprep.subr.bf16.mxu0 0
    %1609 = vmatpush1.bf16.msra.mxu0 %v1599
    %1610 = vmatprep.subr.bf16.mxu0 0
    %1611 = vmatpush1.bf16.msra.mxu0 %v1598
    %1612 = vmatprep.subr.bf16.mxu0 0
    %1613 = vmatpush1.bf16.msra.mxu0 %v1597
    %1614 = vmatprep.subr.bf16.mxu0 0
    %1615 = vmatpush1.bf16.msra.mxu0 %v1596
    %1616 = vmatprep.subr.bf16.mxu0 0
    %1617 = vmatpush1.bf16.msra.mxu0 %v1595
    %1618 = vmatprep.subr.bf16.mxu0 0
    %1619 = vmatpush1.bf16.msra.mxu0 %v1594
    %1620 = vmatprep.subr.bf16.mxu0 0
    %1621 = vmatpush1.bf16.msra.mxu0 %v1593
    %1622 = vmatprep.subr.bf16.mxu0 0
    %1623 = vmatpush1.bf16.msra.mxu0 %v1592
    %1624 = vmatprep.subr.bf16.mxu0 0
    %1625 = vmatpush2.bf16.msra.mxu0 0
    %1626 = vmatprep.subr.bf16.mxu0 0
    %1627 = vmatpush2.bf16.msra.mxu0 0
    %1628 = vmatprep.subr.bf16.mxu0 0
    %1629 = vmatpush2.bf16.msra.mxu0 0
    %1630 = vmatprep.subr.bf16.mxu0 0
    %1631 = vmatpush2.bf16.msra.mxu0 0
    %1632 = vmatprep.subr.bf16.mxu0 0
    %1633 = vmatpush2.bf16.msra.mxu0 0
    %1634 = vmatprep.subr.bf16.mxu0 0
    %1635 = vmatpush2.bf16.msra.mxu0 0
    %1636 = vmatprep.subr.bf16.mxu0 0
    %1637 = vmatpush2.bf16.msra.mxu0 0
    %1638 = vmatprep.subr.bf16.mxu0 0
    %1639 = vmatpush2.bf16.msra.mxu0 0
    %1640 = vmatprep.mubr.bf16.mxu0 0
    %1641 = vmatmul.mubr.bf16.gmra.mxu0 %v1536
    %v1642 = vpop.f32.mrf.mxu0
    %v1643 = vadd.f32 %v1558, %v1642
    %v1644 = vpop.f32.mrf.mxu0
    %v1645 = vpop.f32.mrf.mxu0
    %v1646 = vadd.f32 %v1558, %v1645
    %v1647 = vpop.f32.mrf.mxu0
    %1648 = vdwg.mxu0
    %v1649 = vtanh.pop %v1643
    %v1650 = vtanh.pop %v1646
    %v1651 = vpack.c.bf16 %v1650, %v1649
    %v1652 = vld [vmem:[#allocation18] sm:$0xf]
    %v1653 = vld [vmem:[#allocation18 + $0x4] sm:$0xf]
    %v1654 = vld [vmem:[#allocation18 + $0x8] sm:$0xf]
    %v1655 = vld [vmem:[#allocation18 + $0xc] sm:$0xf]
    %v1656 = vld [vmem:[#allocation18 + $0x10] sm:$0xf]
    %v1657 = vld [vmem:[#allocation18 + $0x14] sm:$0xf]
    %v1658 = vld [vmem:[#allocation18 + $0x18] sm:$0xf]
    %v1659 = vld [vmem:[#allocation18 + $0x1c] sm:$0xf]
    %v1660 = vld [vmem:[#allocation18 + $0x20] sm:$0xf]
    %v1661 = vld [vmem:[#allocation18 + $0x24] sm:$0xf]
    %v1662 = vld [vmem:[#allocation18 + $0x28] sm:$0xf]
    %v1663 = vld [vmem:[#allocation18 + $0x2c] sm:$0xf]
    %v1664 = vld [vmem:[#allocation18 + $0x30] sm:$0xf]
    %v1665 = vld [vmem:[#allocation18 + $0x34] sm:$0xf]
    %v1666 = vld [vmem:[#allocation18 + $0x38] sm:$0xf]
    %v1667 = vld [vmem:[#allocation18 + $0x3c] sm:$0xf]
    %v1668 = vld [vmem:[%s55] sm:$0x1]
    %v1670 = vlaneseq
    %v1671 = vshrl.u32 %v1670, 7
    %v1672 = vsub.s32 0, %v1671
    %v1673 = vrot.slane %v1668, %v1672
    %v1691 = vunpack.c.l.b16 %v1652
    %v1692 = vunpack.c.l.b16 %v1653
    %v1693 = vunpack.c.l.b16 %v1654
    %v1694 = vunpack.c.l.b16 %v1655
    %v1695 = vunpack.c.l.b16 %v1656
    %v1696 = vunpack.c.l.b16 %v1657
    %v1697 = vunpack.c.l.b16 %v1658
    %v1698 = vunpack.c.l.b16 %v1659
    %v1699 = vunpack.c.l.b16 %v1660
    %v1700 = vunpack.c.l.b16 %v1661
    %v1701 = vunpack.c.l.b16 %v1662
    %v1702 = vunpack.c.l.b16 %v1663
    %v1703 = vunpack.c.l.b16 %v1664
    %v1704 = vunpack.c.l.b16 %v1665
    %v1705 = vunpack.c.l.b16 %v1666
    %v1706 = vunpack.c.l.b16 %v1667
    %v1707 = vpack.c.b16 %v1692, %v1691
    %v1708 = vpack.c.b16 %v1694, %v1693
    %v1709 = vpack.c.b16 %v1696, %v1695
    %v1710 = vpack.c.b16 %v1698, %v1697
    %v1711 = vpack.c.b16 %v1700, %v1699
    %v1712 = vpack.c.b16 %v1702, %v1701
    %v1713 = vpack.c.b16 %v1704, %v1703
    %v1714 = vpack.c.b16 %v1706, %v1705
    %1723 = vmatprep.subr.bf16.mxu0 0
    %1724 = vmatpush1.bf16.msra.mxu0 %v1714
    %1725 = vmatprep.subr.bf16.mxu0 0
    %1726 = vmatpush1.bf16.msra.mxu0 %v1713
    %1727 = vmatprep.subr.bf16.mxu0 0
    %1728 = vmatpush1.bf16.msra.mxu0 %v1712
    %1729 = vmatprep.subr.bf16.mxu0 0
    %1730 = vmatpush1.bf16.msra.mxu0 %v1711
    %1731 = vmatprep.subr.bf16.mxu0 0
    %1732 = vmatpush1.bf16.msra.mxu0 %v1710
    %1733 = vmatprep.subr.bf16.mxu0 0
    %1734 = vmatpush1.bf16.msra.mxu0 %v1709
    %1735 = vmatprep.subr.bf16.mxu0 0
    %1736 = vmatpush1.bf16.msra.mxu0 %v1708
    %1737 = vmatprep.subr.bf16.mxu0 0
    %1738 = vmatpush1.bf16.msra.mxu0 %v1707
    %1739 = vmatprep.subr.bf16.mxu0 0
    %1740 = vmatpush2.bf16.msra.mxu0 0
    %1741 = vmatprep.subr.bf16.mxu0 0
    %1742 = vmatpush2.bf16.msra.mxu0 0
    %1743 = vmatprep.subr.bf16.mxu0 0
    %1744 = vmatpush2.bf16.msra.mxu0 0
    %1745 = vmatprep.subr.bf16.mxu0 0
    %1746 = vmatpush2.bf16.msra.mxu0 0
    %1747 = vmatprep.subr.bf16.mxu0 0
    %1748 = vmatpush2.bf16.msra.mxu0 0
    %1749 = vmatprep.subr.bf16.mxu0 0
    %1750 = vmatpush2.bf16.msra.mxu0 0
    %1751 = vmatprep.subr.bf16.mxu0 0
    %1752 = vmatpush2.bf16.msra.mxu0 0
    %1753 = vmatprep.subr.bf16.mxu0 0
    %1754 = vmatpush2.bf16.msra.mxu0 0
    %1755 = vmatprep.mubr.bf16.mxu0 0
    %1756 = vmatmul.mubr.bf16.gmra.mxu0 %v1651
    %v1757 = vpop.f32.mrf.mxu0
    %v1758 = vadd.f32 %v1673, %v1757
    %v1759 = vpop.f32.mrf.mxu0
    %v1760 = vpop.f32.mrf.mxu0
    %v1761 = vadd.f32 %v1673, %v1760
    %v1762 = vpop.f32.mrf.mxu0
    %1763 = vdwg.mxu0
    %v1764 = vpack.c.bf16 %v1534, %v1530
    %v1765 = vld [vmem:[#allocation19] sm:$0xf]
    %v1766 = vld [vmem:[#allocation19 + $0x4] sm:$0xf]
    %v1767 = vld [vmem:[#allocation19 + $0x8] sm:$0xf]
    %v1768 = vld [vmem:[#allocation19 + $0xc] sm:$0xf]
    %v1769 = vld [vmem:[#allocation19 + $0x10] sm:$0xf]
    %v1770 = vld [vmem:[#allocation19 + $0x14] sm:$0xf]
    %v1771 = vld [vmem:[#allocation19 + $0x18] sm:$0xf]
    %v1772 = vld [vmem:[#allocation19 + $0x1c] sm:$0xf]
    %v1773 = vld [vmem:[#allocation19 + $0x20] sm:$0xf]
    %v1774 = vld [vmem:[#allocation19 + $0x24] sm:$0xf]
    %v1775 = vld [vmem:[#allocation19 + $0x28] sm:$0xf]
    %v1776 = vld [vmem:[#allocation19 + $0x2c] sm:$0xf]
    %v1777 = vld [vmem:[#allocation19 + $0x30] sm:$0xf]
    %v1778 = vld [vmem:[#allocation19 + $0x34] sm:$0xf]
    %v1779 = vld [vmem:[#allocation19 + $0x38] sm:$0xf]
    %v1780 = vld [vmem:[#allocation19 + $0x3c] sm:$0xf]
    %v1781 = vld [vmem:[%s59] sm:$0x1]
    %v1783 = vlaneseq
    %v1784 = vshrl.u32 %v1783, 7
    %v1785 = vsub.s32 0, %v1784
    %v1786 = vrot.slane %v1781, %v1785
    %v1804 = vunpack.c.l.b16 %v1765
    %v1805 = vunpack.c.l.b16 %v1766
    %v1806 = vunpack.c.l.b16 %v1767
    %v1807 = vunpack.c.l.b16 %v1768
    %v1808 = vunpack.c.l.b16 %v1769
    %v1809 = vunpack.c.l.b16 %v1770
    %v1810 = vunpack.c.l.b16 %v1771
    %v1811 = vunpack.c.l.b16 %v1772
    %v1812 = vunpack.c.l.b16 %v1773
    %v1813 = vunpack.c.l.b16 %v1774
    %v1814 = vunpack.c.l.b16 %v1775
    %v1815 = vunpack.c.l.b16 %v1776
    %v1816 = vunpack.c.l.b16 %v1777
    %v1817 = vunpack.c.l.b16 %v1778
    %v1818 = vunpack.c.l.b16 %v1779
    %v1819 = vunpack.c.l.b16 %v1780
    %v1820 = vpack.c.b16 %v1805, %v1804
    %v1821 = vpack.c.b16 %v1807, %v1806
    %v1822 = vpack.c.b16 %v1809, %v1808
    %v1823 = vpack.c.b16 %v1811, %v1810
    %v1824 = vpack.c.b16 %v1813, %v1812
    %v1825 = vpack.c.b16 %v1815, %v1814
    %v1826 = vpack.c.b16 %v1817, %v1816
    %v1827 = vpack.c.b16 %v1819, %v1818
    %1836 = vmatprep.subr.bf16.mxu0 0
    %1837 = vmatpush1.bf16.msra.mxu0 %v1827
    %1838 = vmatprep.subr.bf16.mxu0 0
    %1839 = vmatpush1.bf16.msra.mxu0 %v1826
    %1840 = vmatprep.subr.bf16.mxu0 0
    %1841 = vmatpush1.bf16.msra.mxu0 %v1825
    %1842 = vmatprep.subr.bf16.mxu0 0
    %1843 = vmatpush1.bf16.msra.mxu0 %v1824
    %1844 = vmatprep.subr.bf16.mxu0 0
    %1845 = vmatpush1.bf16.msra.mxu0 %v1823
    %1846 = vmatprep.subr.bf16.mxu0 0
    %1847 = vmatpush1.bf16.msra.mxu0 %v1822
    %1848 = vmatprep.subr.bf16.mxu0 0
    %1849 = vmatpush1.bf16.msra.mxu0 %v1821
    %1850 = vmatprep.subr.bf16.mxu0 0
    %1851 = vmatpush1.bf16.msra.mxu0 %v1820
    %1852 = vmatprep.subr.bf16.mxu0 0
    %1853 = vmatpush2.bf16.msra.mxu0 0
    %1854 = vmatprep.subr.bf16.mxu0 0
    %1855 = vmatpush2.bf16.msra.mxu0 0
    %1856 = vmatprep.subr.bf16.mxu0 0
    %1857 = vmatpush2.bf16.msra.mxu0 0
    %1858 = vmatprep.subr.bf16.mxu0 0
    %1859 = vmatpush2.bf16.msra.mxu0 0
    %1860 = vmatprep.subr.bf16.mxu0 0
    %1861 = vmatpush2.bf16.msra.mxu0 0
    %1862 = vmatprep.subr.bf16.mxu0 0
    %1863 = vmatpush2.bf16.msra.mxu0 0
    %1864 = vmatprep.subr.bf16.mxu0 0
    %1865 = vmatpush2.bf16.msra.mxu0 0
    %1866 = vmatprep.subr.bf16.mxu0 0
    %1867 = vmatpush2.bf16.msra.mxu0 0
    %1868 = vmatprep.mubr.bf16.mxu0 0
    %1869 = vmatmul.mubr.bf16.gmra.mxu0 %v1764
    %v1870 = vpop.f32.mrf.mxu0
    %v1871 = vadd.f32 %v1786, %v1870
    %v1872 = vpop.f32.mrf.mxu0
    %v1873 = vpop.f32.mrf.mxu0
    %v1874 = vadd.f32 %v1786, %v1873
    %v1875 = vpop.f32.mrf.mxu0
    %1876 = vdwg.mxu0
    %v1877 = vtanh.pop %v1871
    %v1878 = vtanh.pop %v1874
    %v1879 = vpack.c.bf16 %v1878, %v1877
    %v1880 = vld [vmem:[%s61] sm:$0xf]
    %v1881 = vld [vmem:[%s61 + $0x4] sm:$0xf]
    %v1882 = vld [vmem:[%s61 + $0x8] sm:$0xf]
    %v1883 = vld [vmem:[%s61 + $0xc] sm:$0xf]
    %v1884 = vld [vmem:[%s61 + $0x10] sm:$0xf]
    %v1885 = vld [vmem:[%s61 + $0x14] sm:$0xf]
    %v1886 = vld [vmem:[%s61 + $0x18] sm:$0xf]
    %v1887 = vld [vmem:[%s61 + $0x1c] sm:$0xf]
    %v1888 = vld [vmem:[%s61 + $0x20] sm:$0xf]
    %v1889 = vld [vmem:[%s61 + $0x24] sm:$0xf]
    %v1890 = vld [vmem:[%s61 + $0x28] sm:$0xf]
    %v1891 = vld [vmem:[%s61 + $0x2c] sm:$0xf]
    %v1892 = vld [vmem:[%s61 + $0x30] sm:$0xf]
    %v1893 = vld [vmem:[%s61 + $0x34] sm:$0xf]
    %v1894 = vld [vmem:[%s61 + $0x38] sm:$0xf]
    %v1895 = vld [vmem:[%s61 + $0x3c] sm:$0xf]
    %v1896 = vld [vmem:[%s63] sm:$0x1]
    %v1898 = vlaneseq
    %v1899 = vshrl.u32 %v1898, 7
    %v1900 = vsub.s32 0, %v1899
    %v1901 = vrot.slane %v1896, %v1900
    %v1919 = vunpack.c.l.b16 %v1880
    %v1920 = vunpack.c.l.b16 %v1881
    %v1921 = vunpack.c.l.b16 %v1882
    %v1922 = vunpack.c.l.b16 %v1883
    %v1923 = vunpack.c.l.b16 %v1884
    %v1924 = vunpack.c.l.b16 %v1885
    %v1925 = vunpack.c.l.b16 %v1886
    %v1926 = vunpack.c.l.b16 %v1887
    %v1927 = vunpack.c.l.b16 %v1888
    %v1928 = vunpack.c.l.b16 %v1889
    %v1929 = vunpack.c.l.b16 %v1890
    %v1930 = vunpack.c.l.b16 %v1891
    %v1931 = vunpack.c.l.b16 %v1892
    %v1932 = vunpack.c.l.b16 %v1893
    %v1933 = vunpack.c.l.b16 %v1894
    %v1934 = vunpack.c.l.b16 %v1895
    %v1935 = vpack.c.b16 %v1920, %v1919
    %v1936 = vpack.c.b16 %v1922, %v1921
    %v1937 = vpack.c.b16 %v1924, %v1923
    %v1938 = vpack.c.b16 %v1926, %v1925
    %v1939 = vpack.c.b16 %v1928, %v1927
    %v1940 = vpack.c.b16 %v1930, %v1929
    %v1941 = vpack.c.b16 %v1932, %v1931
    %v1942 = vpack.c.b16 %v1934, %v1933
    %1951 = vmatprep.subr.bf16.mxu0 0
    %1952 = vmatpush1.bf16.msra.mxu0 %v1942
    %1953 = vmatprep.subr.bf16.mxu0 0
    %1954 = vmatpush1.bf16.msra.mxu0 %v1941
    %1955 = vmatprep.subr.bf16.mxu0 0
    %1956 = vmatpush1.bf16.msra.mxu0 %v1940
    %1957 = vmatprep.subr.bf16.mxu0 0
    %1958 = vmatpush1.bf16.msra.mxu0 %v1939
    %1959 = vmatprep.subr.bf16.mxu0 0
    %1960 = vmatpush1.bf16.msra.mxu0 %v1938
    %1961 = vmatprep.subr.bf16.mxu0 0
    %1962 = vmatpush1.bf16.msra.mxu0 %v1937
    %1963 = vmatprep.subr.bf16.mxu0 0
    %1964 = vmatpush1.bf16.msra.mxu0 %v1936
    %1965 = vmatprep.subr.bf16.mxu0 0
    %1966 = vmatpush1.bf16.msra.mxu0 %v1935
    %1967 = vmatprep.subr.bf16.mxu0 0
    %1968 = vmatpush2.bf16.msra.mxu0 0
    %1969 = vmatprep.subr.bf16.mxu0 0
    %1970 = vmatpush2.bf16.msra.mxu0 0
    %1971 = vmatprep.subr.bf16.mxu0 0
    %1972 = vmatpush2.bf16.msra.mxu0 0
    %1973 = vmatprep.subr.bf16.mxu0 0
    %1974 = vmatpush2.bf16.msra.mxu0 0
    %1975 = vmatprep.subr.bf16.mxu0 0
    %1976 = vmatpush2.bf16.msra.mxu0 0
    %1977 = vmatprep.subr.bf16.mxu0 0
    %1978 = vmatpush2.bf16.msra.mxu0 0
    %1979 = vmatprep.subr.bf16.mxu0 0
    %1980 = vmatpush2.bf16.msra.mxu0 0
    %1981 = vmatprep.subr.bf16.mxu0 0
    %1982 = vmatpush2.bf16.msra.mxu0 0
    %1983 = vmatprep.mubr.bf16.mxu0 0
    %1984 = vmatmul.mubr.bf16.gmra.mxu0 %v1879
    %v1985 = vpop.f32.mrf.mxu0
    %v1986 = vadd.f32 %v1901, %v1985
    %v1987 = vpop.f32.mrf.mxu0
    %v1988 = vpop.f32.mrf.mxu0
    %v1989 = vadd.f32 %v1901, %v1988
    %v1990 = vpop.f32.mrf.mxu0
    %1991 = vdwg.mxu0
    %v1992 = vld [vmem:[%s7] sm:$0xff]
    %v1993 = vld [vmem:[%s7 + $0x8] sm:$0xff]
    %1995 = vset.pattern.permute.xlu0 0
    %1996 = vperm.xlu0 %1995, %v1992
    %v1997 = vpop.permute.xlu0 %1996
    %2000 = vset.pattern.permute.xlu0 0
    %2001 = vperm.xlu0 %2000, %v1993
    %v2002 = vpop.permute.xlu0 %2001
    %v2004 = vmul.f32 %v1758, %v1997
    %v2005 = vmul.f32 %v1761, %v2002
    %v2006 = vld [vmem:[%s3] sm:$0xff]
    %v2007 = vld [vmem:[%s3 + $0x8] sm:$0xff]
    %v2008 = vsub.f32 %v2004, %v2006
    %v2009 = vsub.f32 %v2005, %v2007
    %v2010 = vmul.f32 %v1986, %v1997
    %v2011 = vmul.f32 %v1989, %v2002
    %v2012 = vld [vmem:[%s5] sm:$0xff]
    %v2013 = vld [vmem:[%s5 + $0x8] sm:$0xff]
    %v2014 = vsub.f32 %v2010, %v2012
    %v2015 = vsub.f32 %v2011, %v2013
    %v2016 = vmul.f32 %v2008, %v2008
    %v2017 = vmul.f32 %v2009, %v2009
    %v2018 = vadd.f32 %v2016, %v2017
    %2019 = vadd.xlane.f32.xlu0 %v2018
    %v2020 = vpop.xlane.xlu0 %2019
    %v2021 = vrot.slane %v2020, 4
    %v2022 = vadd.f32 %v2020, %v2021
    %v2023 = vrot.slane %v2022, 2
    %v2024 = vadd.f32 %v2022, %v2023
    %v2025 = vrot.slane %v2024, 1
    %v2026 = vadd.f32 %v2024, %v2025
    %s2027 = vtos %v2026
    %v2028 = vmul.f32 %v2014, %v2014
    %v2029 = vmul.f32 %v2015, %v2015
    %v2030 = vadd.f32 %v2028, %v2029
    %2031 = vadd.xlane.f32.xlu0 %v2030
    %v2032 = vpop.xlane.xlu0 %2031
    %v2033 = vrot.slane %v2032, 4
    %v2034 = vadd.f32 %v2032, %v2033
    %v2035 = vrot.slane %v2034, 2
    %v2036 = vadd.f32 %v2034, %v2035
    %v2037 = vrot.slane %v2036, 1
    %v2038 = vadd.f32 %v2036, %v2037
    %s2039 = vtos %v2038
    %v2040 = vlaneseq
    %v2041 = vand.u32 %v2040, 127
    %vm2042 = vcmp.eq.s32.totalorder %v2041, 0
    %vm2043 = vcmp.eq.s32.totalorder %v2041, 1
    %v2044 = vstv %s2039
    %v2045 = vsel %vm2043, %v2044, 0.0
    %v2046 = vstv %s2027
    %v2047 = vsel %vm2042, %v2046, %v2045
    %2048 = vst [vmem:[%s65] sm:$0x1] %v2047
    // Predicated region
    $region178: #{vq_align_forward.1} parent=1 // pred_check
      _
    $region179: #{vq_align_forward.1} parent=1 // pred_check_branch
      %2050 = sbr.rel (0) target = $region181
    $region180: #{vq_align_forward.1} parent=1 // pred_region
      _
    $region181: #{vq_align_forward.1} parent=1 // pred_fallthru
      _
    // Predicated region
    $region182: #{vq_align_forward.1} parent=1 // pred_check
      _
    $region183: #{vq_align_forward.1} parent=1 // pred_check_branch
      %2052 = sbr.rel (0) target = $region185
    $region184: #{vq_align_forward.1} parent=1 // pred_region
      _
    $region185: #{vq_align_forward.1} parent=1 // pred_fallthru
      _
    %2053 = vsyncpa [#allocation3], 1
    %2054 = vsyncpa [#allocation5], 1
    %2055 = vsyncpa [#allocation8], 1
    %2056 = vsyncpa [#allocation11], 1
    %2057 = vsyncpa [#allocation14], 1
    %2058 = vsyncpa [#allocation17], 1
    %2059 = vsyncpa [#allocation20], 1

</llo_original>
